<compile_context>
chip_gen: v6e
topology: v6e:2x2x1
jax: 0.10.0
libtpu: 0.0.40
codegen_flags: <defaults>
</compile_context>

<pallas_src>
import functools

import jax
import jax.numpy as jnp
from jax.experimental import pallas as pl
from jax.experimental.pallas import tpu as pltpu

EPS = 1e-5
VMEM_LIMIT = 32 * 1024 * 1024          # scoped VMEM requested from Mosaic (safe on all gens)
PHASE1_BUDGET = 20 * 1024 * 1024       # explicit tile-byte budget (v7x-safe)
PHASE2_BUDGET = 16 * 1024 * 1024


def _cdiv(a, b):
    return (a + b - 1) // b


def _round_up(v, m):
    return (v + m - 1) // m * m


# --------------------------------------------------------------------------
# Phase 1: one MXU matmul per M tile (bf16 in, f32 acc) + masked per-tile
# channel statistics (sum + mean-centered M2) for Chan's variance combine.
# --------------------------------------------------------------------------
def _conv_stats_kernel(a_ref, w_ref, y_ref, psum_ref, pm2_ref, *, m_rows, tm):
    i = pl.program_id(0)
    y = jnp.dot(a_ref[...], w_ref[...], preferred_element_type=jnp.float32)
    y_ref[...] = y.astype(y_ref.dtype)            # bf16 writeback; stats use f32 y

    # Ragged last tile: rows >= rows_left hold unspecified data -> mask them.
    rows_left = m_rows - i * tm
    row_ids = jax.lax.broadcasted_iota(jnp.int32, y.shape, 0)
    valid = row_ids < rows_left
    cnt = jnp.minimum(rows_left, tm).astype(jnp.float32)

    s = jnp.sum(jnp.where(valid, y, 0.0), axis=0)             # (Cp,) per-tile sum
    mean_t = s / cnt
    d = jnp.where(valid, y - mean_t[None, :], 0.0)
    m2 = jnp.sum(d * d, axis=0)                               # (Cp,) centered SSQ

    psum_ref[...] = jnp.broadcast_to(s[None, None, :], psum_ref.shape)
    pm2_ref[...] = jnp.broadcast_to(m2[None, None, :], pm2_ref.shape)


# --------------------------------------------------------------------------
# Phase 2: folded BatchNorm + ReLU epilogue (one FMA + one max per element).
# --------------------------------------------------------------------------
def _bn_relu_kernel(y_ref, scale_ref, shift_ref, o_ref):
    y = y_ref[...].astype(jnp.float32)
    o_ref[...] = jnp.maximum(y * scale_ref[...] + shift_ref[...], 0.0).astype(o_ref.dtype)


# --------------------------------------------------------------------------
# Host-side helpers.
# --------------------------------------------------------------------------
def _im2col(x, kh, kw, stride, padding):
    """x: (N, C, H, W) -> (N*OH*OW, C*KH*KW) bf16, plus (OH, OW)."""
    if padding > 0:
        x = jnp.pad(x, ((0, 0), (0, 0), (padding, padding), (padding, padding)))
    n, c, h, w = x.shape
    oh = (h - kh) // stride + 1
    ow = (w - kw) // stride + 1
    patches = []
    for i in range(kh):
        for j in range(kw):
            patches.append(
                x[:, :, i:i + stride * oh:stride, j:j + stride * ow:stride]
            )  # (N, C, OH, OW)
    col = jnp.stack(patches, axis=2)                 # (N, C, KH*KW, OH, OW)
    col = col.transpose(0, 3, 4, 1, 2)               # (N, OH, OW, C, KH*KW)
    col = col.reshape(n * oh * ow, c * kh * kw)      # matches weight flattening
    return col, oh, ow


def _plan_phase1(m_rows, k_cols, cp):
    """tm multiple of 16, >=2 tiles when possible, resident-W VMEM accounting."""
    w_bytes = 2 * k_cols * cp * 2                 # resident W (2-buffer accounted)
    stats_bytes = 2 * 2 * 8 * cp * 4              # psum/pm2 double buffers
    per_row = 2 * k_cols * 2 + 2 * cp * 2         # A bf16 x2 bufs + y bf16 x2 bufs
    avail = PHASE1_BUDGET - w_bytes - stats_bytes
    # TODO(synk): add a K-tiled accumulator fallback when W overflows VMEM.
    assert avail >= per_row * 16, "resident-weight plan needs a K-tiled fallback"
    tm = max(16, min(2048, (avail // per_row) // 16 * 16))
    if m_rows > 16:
        # v7x has 2 TensorCores: keep >= 2 M tiles so the parallel axis shards.
        tm = min(tm, _round_up(_cdiv(m_rows, 2), 16))
    return tm, _cdiv(m_rows, tm)


def _plan_phase2(m_rows, cp):
    per_row = 2 * cp * 2 + 2 * cp * 4             # y bf16 x2 bufs + out f32 x2 bufs
    tm = max(16, min(4096, (PHASE2_BUDGET // per_row) // 16 * 16))
    if m_rows > 16:
        tm = min(tm, _round_up(_cdiv(m_rows, 2), 16))
    return tm, _cdiv(m_rows, tm)


@functools.partial(jax.jit, static_argnames=("stride", "padding"))
def conv_bn_relu(x, weight, bias, gamma, beta, *, stride=1, padding=0):
    """x: (N, Cin, H, W); weight: (Cout, Cin, KH, KW); bias/gamma/beta: (Cout,)."""
    n, cin, _, _ = x.shape
    cout, _, kh, kw = weight.shape

    # im2col in bf16 (MXU-native). No M/K padding pass (see kernel masking).
    a, oh, ow = _im2col(x.astype(jnp.bfloat16), kh, kw, stride, padding)
    m_rows, k_cols = a.shape
    cp = _round_up(cout, 128)

    w_mat = weight.reshape(cout, cin * kh * kw).astype(jnp.bfloat16).T  # (K, Cout)
    w_p = jnp.pad(w_mat, ((0, 0), (0, cp - cout)))                       # (K, Cp)

    # Conv bias is dropped: with training-mode (batch-statistic) BatchNorm the
    # per-channel constant is removed exactly by the mean subtraction.
    # NOTE: if this kernel is ever reused with eval-mode (running-stat) BN,
    # the bias must be added back.
    del bias

    tm, num_m = _plan_phase1(m_rows, k_cols, cp)
    kernel1 = functools.partial(_conv_stats_kernel, m_rows=m_rows, tm=tm)

    y, psum, pm2 = pl.pallas_call(
        kernel1,
        out_shape=(
            jax.ShapeDtypeStruct((m_rows, cp), jnp.bfloat16),    # bf16 intermediate
            jax.ShapeDtypeStruct((num_m, 8, cp), jnp.float32),   # per-tile sums
            jax.ShapeDtypeStruct((num_m, 8, cp), jnp.float32),   # per-tile M2
        ),
        grid_spec=pltpu.PrefetchScalarGridSpec(
            num_scalar_prefetch=0,
            grid=(num_m,),
            in_specs=[
                pl.BlockSpec((tm, k_cols), lambda i: (i, 0)),
                pl.BlockSpec((k_cols, cp), lambda i: (0, 0)),    # VMEM-resident W
            ],
            out_specs=(
                pl.BlockSpec((tm, cp), lambda i: (i, 0)),
                pl.BlockSpec((1, 8, cp), lambda i: (i, 0, 0)),
                pl.BlockSpec((1, 8, cp), lambda i: (i, 0, 0)),
            ),
        ),
        compiler_params=pltpu.CompilerParams(
            dimension_semantics=("parallel",),
            vmem_limit_bytes=VMEM_LIMIT,
        ),
    )(a, w_p)

    # Chan's parallel-variance combine on tiny (num_m, Cp) partials, then fold
    # BatchNorm into a single per-channel scale/shift.
    counts = jnp.minimum(m_rows - jnp.arange(num_m) * tm, tm).astype(jnp.float32)
    sums = psum[:, 0, :]                                  # (num_m, Cp)
    m2s = pm2[:, 0, :]                                    # (num_m, Cp)
    mean_t = sums / counts[:, None]
    mean = jnp.sum(sums, axis=0) / m_rows
    m2 = jnp.sum(m2s, axis=0) + jnp.sum(
        counts[:, None] * (mean_t - mean[None, :]) ** 2, axis=0)
    var = m2 / m_rows                                     # biased variance (PyTorch BN)

    g_p = jnp.pad(gamma.astype(jnp.float32), (0, cp - cout), constant_values=1.0)
    b_p = jnp.pad(beta.astype(jnp.float32), (0, cp - cout))
    scale = (g_p * jax.lax.rsqrt(var + EPS)).reshape(1, cp)
    shift = (b_p - mean * scale[0]).reshape(1, cp)

    tm2, num_m2 = _plan_phase2(m_rows, cp)
    out = pl.pallas_call(
        _bn_relu_kernel,
        out_shape=jax.ShapeDtypeStruct((m_rows, cp), jnp.float32),
        grid_spec=pltpu.PrefetchScalarGridSpec(
            num_scalar_prefetch=0,
            grid=(num_m2,),
            in_specs=[
                pl.BlockSpec((tm2, cp), lambda i: (i, 0)),
                pl.BlockSpec((1, cp), lambda i: (0, 0)),
                pl.BlockSpec((1, cp), lambda i: (0, 0)),
            ],
            out_specs=pl.BlockSpec((tm2, cp), lambda i: (i, 0)),
        ),
        compiler_params=pltpu.CompilerParams(
            dimension_semantics=("parallel",),
            vmem_limit_bytes=VMEM_LIMIT,
        ),
    )(y, scale, shift)

    # TODO(synk): return NHWC to skip this XLA transpose when downstream allows.
    out = out[:, :cout].reshape(n, oh, ow, cout).transpose(0, 3, 1, 2)
    return out


# --------------------------------------------------------------------------
# Reference (f32 math on bf16-rounded conv inputs, matching MXU input dtype).
# --------------------------------------------------------------------------
def _reference(x, weight, bias, gamma, beta, stride, padding):
    xr = x.astype(jnp.bfloat16).astype(jnp.float32)
    wr = weight.astype(jnp.bfloat16).astype(jnp.float32)
    y = jax.lax.conv_general_dilated(
        xr, wr, window_strides=(stride, stride),
        padding=[(padding, padding), (padding, padding)],
        dimension_numbers=("NCHW", "OIHW", "NCHW"))
    y = y + bias.reshape(1, -1, 1, 1)
    mean = jnp.mean(y, axis=(0, 2, 3), keepdims=True)
    var = jnp.mean((y - mean) ** 2, axis=(0, 2, 3), keepdims=True)
    y = (y - mean) * jax.lax.rsqrt(var + EPS)
    y = y * gamma.reshape(1, -1, 1, 1) + beta.reshape(1, -1, 1, 1)
    return jnp.maximum(y, 0.0)


if __name__ == "__main__":
    key = jax.random.PRNGKey(0)
    kx, kw_, kb = jax.random.split(key, 3)

    # Module config: Conv_BN_ReLU(in_channels=4, out_channels=8, kernel_size=3,
    #                             stride=1, padding=0, bias=True)
    N, Cin, H, W = 2, 4, 16, 16
    Cout, KH, KW = 8, 3, 3
    stride, padding = 1, 0

    x = jax.random.normal(kx, (N, Cin, H, W), dtype=jnp.float32)
    weight = jax.random.normal(kw_, (Cout, Cin, KH, KW), dtype=jnp.float32) * 0.1
    bias = jax.random.normal(kb, (Cout,), dtype=jnp.float32) * 0.1
    gamma = jnp.ones((Cout,), dtype=jnp.float32)   # BatchNorm2d default init
    beta = jnp.zeros((Cout,), dtype=jnp.float32)

    out = conv_bn_relu(x, weight, bias, gamma, beta,
                       stride=stride, padding=padding)
    jax.block_until_ready(out)

    ref = _reference(x, weight, bias, gamma, beta, stride, padding)
    assert out.shape == (N, Cout, H - KH + 1, W - KW + 1)
    # The conv runs on bf16 inputs and the conv output is stored in bf16 between
    # the two kernels; vs. the f32-intermediate reference this gives ~1e-2-level
    # absolute error on the unit-variance BN output (documented precision trade).
    err = float(jnp.max(jnp.abs(out - ref)))
    assert err < 2.5e-2, f"mismatch vs reference: {err}"
    print("KERNEL_OK")
</pallas_src>

<mosaic_0001>
module attributes {stable_mosaic.version = 11 : i64} {
  func.func @_conv_stats_kernel(%arg0: i32, %arg1: memref<208x36xbf16, #tpu.memory_space<vmem>>, %arg2: memref<36x128xbf16, #tpu.memory_space<vmem>>, %arg3: memref<208x128xbf16, #tpu.memory_space<vmem>>, %arg4: memref<1x8x128xf32, #tpu.memory_space<vmem>>, %arg5: memref<1x8x128xf32, #tpu.memory_space<vmem>>) attributes {dimension_semantics = [#tpu.dimension_semantics<parallel>], iteration_bounds = array<i64: 2>, scalar_prefetch = 0 : i64, scratch_operands = 0 : i64, tpu.core_type = #tpu.core_type<tc>, window_params = [{transform_indices = @transform_0, window_bounds = array<i64: 208, 36>}, {pipeline_mode = #tpu.pipeline_mode<synchronous>, transform_indices = @transform_1, window_bounds = array<i64: 36, 128>}, {transform_indices = @transform_2, window_bounds = array<i64: 208, 128>}, {transform_indices = @transform_3, window_bounds = array<i64: 1, 8, 128>}, {transform_indices = @transform_4, window_bounds = array<i64: 1, 8, 128>}]} {
    %c0 = arith.constant 0 : index
    %c0_0 = arith.constant 0 : index
    %0 = vector.load %arg1[%c0, %c0_0] : memref<208x36xbf16, #tpu.memory_space<vmem>>, vector<208x36xbf16>
    %c0_1 = arith.constant 0 : index
    %c0_2 = arith.constant 0 : index
    %1 = vector.load %arg2[%c0_1, %c0_2] : memref<36x128xbf16, #tpu.memory_space<vmem>>, vector<36x128xbf16>
    %cst = arith.constant dense<0.000000e+00> : vector<208x128xf32>
    %2 = tpu.matmul %0, %1, %cst {dimension_numbers = #tpu.dot_dimension_numbers<[1], [0], [0], [1], [0, 0, 1, 1], [], []>} : vector<208x36xbf16>, vector<36x128xbf16>, vector<208x128xf32> -> vector<208x128xf32>
    %3 = arith.truncf %2 : vector<208x128xf32> to vector<208x128xbf16>
    %c0_3 = arith.constant 0 : index
    %c0_4 = arith.constant 0 : index
    %4 = vector.load %arg3[%c0_3, %c0_4] : memref<208x128xbf16, #tpu.memory_space<vmem>>, vector<208x128xbf16>
    tpu.vector_store %arg3[%c0_3, %c0_4], %3 {strides = array<i32>} : memref<208x128xbf16, #tpu.memory_space<vmem>>, vector<208x128xbf16>,
    %c208_i32 = arith.constant 208 : i32
    %5 = arith.muli %arg0, %c208_i32 : i32
    %c392_i32 = arith.constant 392 : i32
    %6 = arith.subi %c392_i32, %5 : i32
    %7 = tpu.iota {dimensions = array<i32: 0>} : vector<208x128xi32>
    %8 = vector.broadcast %6 : i32 to vector<208x128xi32>
    %9 = arith.cmpi slt, %7, %8 : vector<208x128xi32>
    %c208_i32_5 = arith.constant 208 : i32
    %10 = arith.minsi %6, %c208_i32_5 : i32
    %11 = arith.sitofp %10 : i32 to f32
    %cst_6 = arith.constant 0.000000e+00 : f32
    %12 = vector.broadcast %cst_6 : f32 to vector<208x128xf32>
    %13 = arith.select %9, %2, %12 : vector<208x128xi1>, vector<208x128xf32>
    %cst_7 = arith.constant dense<0.000000e+00> : vector<128xf32>
    %14 = vector.multi_reduction <add>, %13, %cst_7 [0] : vector<208x128xf32> to vector<128xf32>
    %15 = vector.broadcast %11 : f32 to vector<128xf32>
    %16 = arith.divf %14, %15 : vector<128xf32>
    %17 = vector.shape_cast %16 : vector<128xf32> to vector<1x128xf32>
    %18 = vector.broadcast %17 : vector<1x128xf32> to vector<208x128xf32>
    %19 = arith.subf %2, %18 : vector<208x128xf32>
    %cst_8 = arith.constant 0.000000e+00 : f32
    %20 = vector.broadcast %cst_8 : f32 to vector<208x128xf32>
    %21 = arith.select %9, %19, %20 : vector<208x128xi1>, vector<208x128xf32>
    %22 = arith.mulf %21, %21 : vector<208x128xf32>
    %cst_9 = arith.constant dense<0.000000e+00> : vector<128xf32>
    %23 = vector.multi_reduction <add>, %22, %cst_9 [0] : vector<208x128xf32> to vector<128xf32>
    %24 = vector.shape_cast %14 : vector<128xf32> to vector<1x1x128xf32>
    %25 = vector.shape_cast %24 : vector<1x1x128xf32> to vector<1x1x128xf32>
    %26 = vector.broadcast %25 : vector<1x1x128xf32> to vector<1x8x128xf32>
    %c0_10 = arith.constant 0 : index
    %c0_11 = arith.constant 0 : index
    %c0_12 = arith.constant 0 : index
    %27 = vector.load %arg4[%c0_10, %c0_11, %c0_12] : memref<1x8x128xf32, #tpu.memory_space<vmem>>, vector<1x8x128xf32>
    tpu.vector_store %arg4[%c0_10, %c0_11, %c0_12], %26 {strides = array<i32>} : memref<1x8x128xf32, #tpu.memory_space<vmem>>, vector<1x8x128xf32>,
    %28 = vector.shape_cast %23 : vector<128xf32> to vector<1x1x128xf32>
    %29 = vector.shape_cast %28 : vector<1x1x128xf32> to vector<1x1x128xf32>
    %30 = vector.broadcast %29 : vector<1x1x128xf32> to vector<1x8x128xf32>
    %c0_13 = arith.constant 0 : index
    %c0_14 = arith.constant 0 : index
    %c0_15 = arith.constant 0 : index
    %31 = vector.load %arg5[%c0_13, %c0_14, %c0_15] : memref<1x8x128xf32, #tpu.memory_space<vmem>>, vector<1x8x128xf32>
    tpu.vector_store %arg5[%c0_13, %c0_14, %c0_15], %30 {strides = array<i32>} : memref<1x8x128xf32, #tpu.memory_space<vmem>>, vector<1x8x128xf32>,
    return
  }
  func.func @transform_0(%arg0: i32) -> (i32, i32) {
    %c0_i32 = arith.constant 0 : i32
    %c0_i32_0 = arith.constant 0 : i32
    return %arg0, %c0_i32 : i32, i32
  }
  func.func @transform_1(%arg0: i32) -> (i32, i32) {
    %c0_i32 = arith.constant 0 : i32
    %c0_i32_0 = arith.constant 0 : i32
    %c0_i32_1 = arith.constant 0 : i32
    return %c0_i32, %c0_i32_0 : i32, i32
  }
  func.func @transform_2(%arg0: i32) -> (i32, i32) {
    %c0_i32 = arith.constant 0 : i32
    %c0_i32_0 = arith.constant 0 : i32
    return %arg0, %c0_i32 : i32, i32
  }
  func.func @transform_3(%arg0: i32) -> (i32, i32, i32) {
    %c0_i32 = arith.constant 0 : i32
    %c0_i32_0 = arith.constant 0 : i32
    %c0_i32_1 = arith.constant 0 : i32
    return %arg0, %c0_i32, %c0_i32_0 : i32, i32, i32
  }
  func.func @transform_4(%arg0: i32) -> (i32, i32, i32) {
    %c0_i32 = arith.constant 0 : i32
    %c0_i32_0 = arith.constant 0 : i32
    %c0_i32_1 = arith.constant 0 : i32
    return %arg0, %c0_i32, %c0_i32_0 : i32, i32, i32
  }
}

module attributes {stable_mosaic.version = 11 : i64} {
  func.func @_bn_relu_kernel(%arg0: i32, %arg1: memref<208x128xbf16, #tpu.memory_space<vmem>>, %arg2: memref<1x128xf32, #tpu.memory_space<vmem>>, %arg3: memref<1x128xf32, #tpu.memory_space<vmem>>, %arg4: memref<208x128xf32, #tpu.memory_space<vmem>>) attributes {dimension_semantics = [#tpu.dimension_semantics<parallel>], iteration_bounds = array<i64: 2>, scalar_prefetch = 0 : i64, scratch_operands = 0 : i64, tpu.core_type = #tpu.core_type<tc>, window_params = [{transform_indices = @transform_0, window_bounds = array<i64: 208, 128>}, {pipeline_mode = #tpu.pipeline_mode<synchronous>, transform_indices = @transform_1, window_bounds = array<i64: 1, 128>}, {pipeline_mode = #tpu.pipeline_mode<synchronous>, transform_indices = @transform_2, window_bounds = array<i64: 1, 128>}, {transform_indices = @transform_3, window_bounds = array<i64: 208, 128>}]} {
    %c0 = arith.constant 0 : index
    %c0_0 = arith.constant 0 : index
    %0 = vector.load %arg1[%c0, %c0_0] : memref<208x128xbf16, #tpu.memory_space<vmem>>, vector<208x128xbf16>
    %1 = arith.extf %0 : vector<208x128xbf16> to vector<208x128xf32>
    %c0_1 = arith.constant 0 : index
    %c0_2 = arith.constant 0 : index
    %2 = vector.load %arg2[%c0_1, %c0_2] : memref<1x128xf32, #tpu.memory_space<vmem>>, vector<1x128xf32>
    %3 = vector.broadcast %2 : vector<1x128xf32> to vector<208x128xf32>
    %4 = arith.mulf %1, %3 : vector<208x128xf32>
    %c0_3 = arith.constant 0 : index
    %c0_4 = arith.constant 0 : index
    %5 = vector.load %arg3[%c0_3, %c0_4] : memref<1x128xf32, #tpu.memory_space<vmem>>, vector<1x128xf32>
    %6 = vector.broadcast %5 : vector<1x128xf32> to vector<208x128xf32>
    %7 = arith.addf %4, %6 : vector<208x128xf32>
    %cst = arith.constant 0.000000e+00 : f32
    %8 = vector.broadcast %cst : f32 to vector<208x128xf32>
    %9 = arith.maximumf %7, %8 : vector<208x128xf32>
    %c0_5 = arith.constant 0 : index
    %c0_6 = arith.constant 0 : index
    %10 = vector.load %arg4[%c0_5, %c0_6] : memref<208x128xf32, #tpu.memory_space<vmem>>, vector<208x128xf32>
    tpu.vector_store %arg4[%c0_5, %c0_6], %9 {strides = array<i32>} : memref<208x128xf32, #tpu.memory_space<vmem>>, vector<208x128xf32>,
    return
  }
  func.func @transform_0(%arg0: i32) -> (i32, i32) {
    %c0_i32 = arith.constant 0 : i32
    %c0_i32_0 = arith.constant 0 : i32
    return %arg0, %c0_i32 : i32, i32
  }
  func.func @transform_1(%arg0: i32) -> (i32, i32) {
    %c0_i32 = arith.constant 0 : i32
    %c0_i32_0 = arith.constant 0 : i32
    %c0_i32_1 = arith.constant 0 : i32
    return %c0_i32, %c0_i32_0 : i32, i32
  }
  func.func @transform_2(%arg0: i32) -> (i32, i32) {
    %c0_i32 = arith.constant 0 : i32
    %c0_i32_0 = arith.constant 0 : i32
    %c0_i32_1 = arith.constant 0 : i32
    return %c0_i32, %c0_i32_0 : i32, i32
  }
  func.func @transform_3(%arg0: i32) -> (i32, i32) {
    %c0_i32 = arith.constant 0 : i32
    %c0_i32_0 = arith.constant 0 : i32
    return %arg0, %c0_i32 : i32, i32
  }
}

</mosaic_0001>

<llo_original>
// kernel: conv_bn_relu.3
$region0: #{conv_bn_relu.3}
  #allocation0 [shape = 'u32[]', space=smem, size = 0x4, offset = 0x4, fixed_abs, tag = 'smem constant byte address 0x4 - core index']
  #allocation1 [shape = 'u32[144,128]{1,0:T(1,128)}', space=vmem, size = 0x12000, scoped, tag = 'internal scratch']
  %s0 = inlined_call_operand.vmem [shape: bf16[392,128], index: 0, kind: input, shape index: {}]
  %s1 = inlined_call_operand.vmem [shape: f32[1,128], index: 1, kind: input, shape index: {}]
  %s2 = inlined_call_operand.vmem [shape: f32[1,128], index: 2, kind: input, shape index: {}]
  %s3 = inlined_call_operand.vmem [shape: f32[392,128], index: 3, kind: output, shape index: {}]
  %s4 = sld [smem:[#allocation0]]
  $region93: #{conv_bn_relu.3} parent=0
    _
  %s6 = ssub.s32 1, %s4
  %s7 = scalar_select 0, %s6, %s4
  $region1: #{conv_bn_relu.3} parent=0
    #allocation2 [shape = 'u8[212992]{0}', space=vmem, size = 0x34000, scoped, tag = 'output window, operand 0']
    loop: start=0, step=1, limit=4
    $region2: #{conv_bn_relu.3} parent=1 // loop_pre_header
      _
    $region3: #{conv_bn_relu.3} parent=1 // loop_header
      %s9 = sphi 0, %s13
      %p10 = scmp.ge.s32.totalorder %s9, 4
      %s19 = sphi 0, %s21
      %s22 = sphi 0, %s19
      %s23 = sphi 0, %s22
      %s39 = sphi 0, %s23
      %s43 = sphi 0, %s43
      %s45 = sphi 0, %s43
      %s46 = sphi 0, %s45
      %s60 = sphi 0, %s46
      %s64 = sphi 0, %s64
      %s66 = sphi 0, %s64
      %s67 = sphi 0, %s66
      %s81 = sphi 0, %s67
      %s87 = sphi 0, %s89
      %s90 = sphi 0, %s87
      %s91 = sphi 0, %s90
      %s107 = sphi 0, %s91
    $region4: #{conv_bn_relu.3} parent=1 // loop_header_branch
      %12 = sbr.rel (%p10) target = $region8
    $region5: #{conv_bn_relu.3} parent=1 // loop_body
      %s14 = ssub.s32 %s9, 1
      %s15 = ssub.s32 %s9, 2
      %s16 = sadd.s32 %s9, 1
      %s17 = ssub.s32 %s9, %s16
      %p18 = scmp.eq.s32.totalorder %s17, 0
      %s20 = sadd.s32 %s19, 1
      %s21 = scalar_select %p18, %s19, %s20
      %p24 = pneg %p18
      %p25 = scmp.eq.s32.totalorder %s9, 1
      %p26 = por %p24, %p25
      %p27 = scmp.ne.s32.totalorder %s19, %s22
      %p28 = scmp.eq.s32.totalorder %s9, 0
      %p29 = por %p27, %p28
      %p30 = scmp.ne.s32.totalorder %s19, %s22
      %p31 = scmp.eq.s32.totalorder %s14, 1
      %p32 = por %p30, %p31
      %p33 = scmp.ne.s32.totalorder %s22, %s23
      %p34 = scmp.eq.s32.totalorder %s14, 0
      %p35 = por %p33, %p34
      %p36 = scmp.ne.s32.totalorder %s22, %s23
      %p37 = scmp.eq.s32.totalorder %s15, 1
      %p38 = por %p36, %p37
      %p40 = scmp.ne.s32.totalorder %s23, %s39
      %p41 = scmp.eq.s32.totalorder %s15, 0
      %p42 = por %p40, %p41
      %s44 = sadd.s32 %s43, 1
      %p47 = scmp.eq.s32.totalorder %s9, 1
      %p48 = scmp.ne.s32.totalorder %s43, %s45
      %p49 = scmp.eq.s32.totalorder %s9, 0
      %p50 = por %p48, %p49
      %p51 = scmp.ne.s32.totalorder %s43, %s45
      %p52 = scmp.eq.s32.totalorder %s14, 1
      %p53 = por %p51, %p52
      %p54 = scmp.ne.s32.totalorder %s45, %s46
      %p55 = scmp.eq.s32.totalorder %s14, 0
      %p56 = por %p54, %p55
      %p57 = scmp.ne.s32.totalorder %s45, %s46
      %p58 = scmp.eq.s32.totalorder %s15, 1
      %p59 = por %p57, %p58
      %p61 = scmp.ne.s32.totalorder %s46, %s60
      %p62 = scmp.eq.s32.totalorder %s15, 0
      %p63 = por %p61, %p62
      %s65 = sadd.s32 %s64, 1
      %p68 = scmp.eq.s32.totalorder %s9, 1
      %p69 = scmp.ne.s32.totalorder %s64, %s66
      %p70 = scmp.eq.s32.totalorder %s9, 0
      %p71 = por %p69, %p70
      %p72 = scmp.ne.s32.totalorder %s64, %s66
      %p73 = scmp.eq.s32.totalorder %s14, 1
      %p74 = por %p72, %p73
      %p75 = scmp.ne.s32.totalorder %s66, %s67
      %p76 = scmp.eq.s32.totalorder %s14, 0
      %p77 = por %p75, %p76
      %p78 = scmp.ne.s32.totalorder %s66, %s67
      %p79 = scmp.eq.s32.totalorder %s15, 1
      %p80 = por %p78, %p79
      %p82 = scmp.ne.s32.totalorder %s67, %s81
      %p83 = scmp.eq.s32.totalorder %s15, 0
      %p84 = por %p82, %p83
      %s85 = ssub.s32 %s9, %s16
      %p86 = scmp.eq.s32.totalorder %s85, 0
      %s88 = sadd.s32 %s87, 1
      %s89 = scalar_select %p86, %s87, %s88
      %p92 = pneg %p86
      %p93 = scmp.eq.s32.totalorder %s9, 1
      %p94 = por %p92, %p93
      %p95 = scmp.ne.s32.totalorder %s87, %s90
      %p96 = scmp.eq.s32.totalorder %s9, 0
      %p97 = por %p95, %p96
      %p98 = scmp.ne.s32.totalorder %s87, %s90
      %p99 = scmp.eq.s32.totalorder %s14, 1
      %p100 = por %p98, %p99
      %p101 = scmp.ne.s32.totalorder %s90, %s91
      %p102 = scmp.eq.s32.totalorder %s14, 0
      %p103 = por %p101, %p102
      %p104 = scmp.ne.s32.totalorder %s90, %s91
      %p105 = scmp.eq.s32.totalorder %s15, 1
      %p106 = por %p104, %p105
      %p108 = scmp.ne.s32.totalorder %s91, %s107
      %p109 = scmp.eq.s32.totalorder %s15, 0
      %p110 = por %p108, %p109
      %p111 = scmp.le.s32.totalorder 1, %s9
      %p112 = scmp.lt.s32.totalorder %s9, 3
      %p113 = pnand %p111, %p112
      %p114 = pneg %p113
      // Predicated region
      $region9: #{conv_bn_relu.3} parent=5 // pred_check
        _
      $region10: #{conv_bn_relu.3} parent=5 // pred_check_branch
        %116 = sbr.rel (%p113) target = $region12
      $region11: #{conv_bn_relu.3} parent=5 // pred_region
        %s117 = ssub.s32 %s9, 1
        // Predicated region
        $region13: #{conv_bn_relu.3} parent=11 // pred_check
          %p118 = pneg %p56
        $region14: #{conv_bn_relu.3} parent=11 // pred_check_branch
          %120 = sbr.rel (%p118) target = $region16
        $region15: #{conv_bn_relu.3} parent=11 // pred_region
          _
        $region16: #{conv_bn_relu.3} parent=11 // pred_fallthru
          _
        // Predicated region
        $region17: #{conv_bn_relu.3} parent=11 // pred_check
          %p121 = pneg %p77
        $region18: #{conv_bn_relu.3} parent=11 // pred_check_branch
          %123 = sbr.rel (%p121) target = $region20
        $region19: #{conv_bn_relu.3} parent=11 // pred_region
          _
        $region20: #{conv_bn_relu.3} parent=11 // pred_fallthru
          _
      $region12: #{conv_bn_relu.3} parent=5 // pred_fallthru
        _
      %p124 = scmp.lt.s32.totalorder %s9, 2
      // Predicated region
      $region21: #{conv_bn_relu.3} parent=5 // pred_check
        %p125 = pneg %p124
      $region22: #{conv_bn_relu.3} parent=5 // pred_check_branch
        %127 = sbr.rel (%p125) target = $region24
      $region23: #{conv_bn_relu.3} parent=5 // pred_region
        // Predicated region
        $region25: #{conv_bn_relu.3} parent=23 // pred_check
          %p128 = pneg %p29
        $region26: #{conv_bn_relu.3} parent=23 // pred_check_branch
          %130 = sbr.rel (%p128) target = $region28
        $region27: #{conv_bn_relu.3} parent=23 // pred_region
          %s131 = smul.u32 26, %s9
          %s132 = ssub.s32 49, %s131
          %p133 = scmp.lt.s32.totalorder %s132, 26
          %s134 = scalar_select %p133, %s132, 26
          %s135 = smul.u32 64, %s134
          %p136 = scmp.lt.s32.totalorder %s131, 48
          %s137 = scalar_select %p136, %s131, 48
          %s138 = smul.addr %s137, 4
          %s139 = scalar_lea.vmem %s0, %s138
          %s140 = smul.u32 26, %s9
          %s141 = ssub.s32 49, %s140
          %p142 = scmp.lt.s32.totalorder %s141, 26
          %s143 = scalar_select %p142, %s141, 26
          %s144 = smul.u32 64, %s143
        $region28: #{conv_bn_relu.3} parent=23 // pred_fallthru
          _
      $region24: #{conv_bn_relu.3} parent=5 // pred_fallthru
        _
      %p145 = scmp.le.s32.totalorder 1, %s9
      %p146 = scmp.lt.s32.totalorder %s9, 3
      %p147 = pnand %p145, %p146
      %p148 = pneg %p147
      // Predicated region
      $region29: #{conv_bn_relu.3} parent=5 // pred_check
        _
      $region30: #{conv_bn_relu.3} parent=5 // pred_check_branch
        %150 = sbr.rel (%p147) target = $region32
      $region31: #{conv_bn_relu.3} parent=5 // pred_region
        %s151 = ssub.s32 %s9, 1
        %s152 = smul.u32 26, %s14
        %s153 = ssub.s32 49, %s152
        %p154 = scmp.lt.s32.totalorder %s153, 26
        %s155 = scalar_select %p154, %s153, 26
        %s156 = smul.u32 64, %s155
        %p157 = scmp.lt.s32.totalorder %s152, 48
        %s158 = scalar_select %p157, %s152, 48
        %s159 = smul.addr %s158, 4
        %s160 = scalar_lea.vmem %s0, %s159
        %p161 = pneg %p35
        %p162 = pneg %p32
        %p163 = pneg %p56
        %p164 = pneg %p53
        %p165 = pneg %p77
        %p166 = pneg %p74
        %p167 = pneg %p103
        %p168 = pneg %p100
        %s169 = sand.u32 %s90, 1
        %s170 = sand.u32 %s90, 1
        %s171 = smul.addr %s170, 208
        %s172 = scalar_lea.vmem [#allocation2], %s171
        %s173 = smul.u32 26, %s14
        %s174 = ssub.s32 49, %s173
        %p175 = scmp.lt.s32.totalorder %s174, 26
        %s176 = scalar_select %p175, %s174, 26
        %s177 = smul.u32 64, %s176
        %p178 = scmp.lt.s32.totalorder %s173, 48
        %s179 = scalar_select %p178, %s173, 48
        %s180 = smul.addr %s179, 4
        %s181 = scalar_lea.vmem %s0, %s180
        %s182 = smul.u32 26, %s14
        %s183 = ssub.s32 49, %s182
        %p184 = scmp.lt.s32.totalorder %s183, 26
        %s185 = scalar_select %p184, %s183, 26
        %s186 = smul.u32 64, %s185
        %s187 = smul.u32 26, %s14
        %s188 = ssub.s32 49, %s187
        %p189 = scmp.lt.s32.totalorder %s188, 26
        %s190 = scalar_select %p189, %s188, 26
        %s191 = smul.u32 128, %s190
        %v192 = vld [vmem:[%s181] sm:$0xf]
        %v193 = vld [vmem:[%s181 + $0x4] sm:$0xf]
        %v194 = vld [vmem:[%s181 + $0x8] sm:$0xf]
        %v195 = vld [vmem:[%s181 + $0xc] sm:$0xf]
        %v196 = vld [vmem:[%s181 + $0x10] sm:$0xf]
        %v197 = vld [vmem:[%s181 + $0x14] sm:$0xf]
        %v198 = vld [vmem:[%s181 + $0x18] sm:$0xf]
        %v199 = vld [vmem:[%s181 + $0x1c] sm:$0xf]
        %v200 = vld [vmem:[%s181 + $0x20] sm:$0xf]
        %v201 = vld [vmem:[%s181 + $0x24] sm:$0xf]
        %v202 = vld [vmem:[%s181 + $0x28] sm:$0xf]
        %v203 = vld [vmem:[%s181 + $0x2c] sm:$0xf]
        %v204 = vld [vmem:[%s181 + $0x30] sm:$0xf]
        %v205 = vld [vmem:[%s181 + $0x34] sm:$0xf]
        %v206 = vld [vmem:[%s181 + $0x38] sm:$0xf]
        %v207 = vld [vmem:[%s181 + $0x3c] sm:$0xf]
        %v208 = vld [vmem:[%s181 + $0x40] sm:$0xf]
        %v209 = vld [vmem:[%s181 + $0x44] sm:$0xf]
        %v210 = vld [vmem:[%s181 + $0x48] sm:$0xf]
        %v211 = vld [vmem:[%s181 + $0x4c] sm:$0xf]
        %v212 = vld [vmem:[%s181 + $0x50] sm:$0xf]
        %v213 = vld [vmem:[%s181 + $0x54] sm:$0xf]
        %v214 = vld [vmem:[%s181 + $0x58] sm:$0xf]
        %v215 = vld [vmem:[%s181 + $0x5c] sm:$0xf]
        %v216 = vld [vmem:[%s181 + $0x60] sm:$0xf]
        %v217 = vld [vmem:[%s181 + $0x64] sm:$0xf]
        %v218 = vunpack.c.l.bf16 %v192
        %v219 = vunpack.c.l.bf16 %v193
        %v220 = vunpack.c.l.bf16 %v194
        %v221 = vunpack.c.l.bf16 %v195
        %v222 = vunpack.c.l.bf16 %v196
        %v223 = vunpack.c.l.bf16 %v197
        %v224 = vunpack.c.l.bf16 %v198
        %v225 = vunpack.c.l.bf16 %v199
        %v226 = vunpack.c.l.bf16 %v200
        %v227 = vunpack.c.l.bf16 %v201
        %v228 = vunpack.c.l.bf16 %v202
        %v229 = vunpack.c.l.bf16 %v203
        %v230 = vunpack.c.l.bf16 %v204
        %v231 = vunpack.c.l.bf16 %v205
        %v232 = vunpack.c.l.bf16 %v206
        %v233 = vunpack.c.l.bf16 %v207
        %v234 = vunpack.c.l.bf16 %v208
        %v235 = vunpack.c.l.bf16 %v209
        %v236 = vunpack.c.l.bf16 %v210
        %v237 = vunpack.c.l.bf16 %v211
        %v238 = vunpack.c.l.bf16 %v212
        %v239 = vunpack.c.l.bf16 %v213
        %v240 = vunpack.c.l.bf16 %v214
        %v241 = vunpack.c.l.bf16 %v215
        %v242 = vunpack.c.l.bf16 %v216
        %v243 = vunpack.c.l.bf16 %v217
        %v244 = vld [vmem:[%s1] sm:$0x1]
        %v246 = vlaneseq
        %v247 = vshrl.u32 %v246, 7
        %v248 = vsub.s32 0, %v247
        %v249 = vrot.slane %v244, %v248
        %v251 = vmul.f32 %v218, %v249
        %v252 = vmul.f32 %v219, %v249
        %v253 = vmul.f32 %v220, %v249
        %v254 = vmul.f32 %v221, %v249
        %v255 = vmul.f32 %v222, %v249
        %v256 = vmul.f32 %v223, %v249
        %v257 = vmul.f32 %v224, %v249
        %v258 = vmul.f32 %v225, %v249
        %v259 = vmul.f32 %v226, %v249
        %v260 = vmul.f32 %v227, %v249
        %v261 = vmul.f32 %v228, %v249
        %v262 = vmul.f32 %v229, %v249
        %v263 = vmul.f32 %v230, %v249
        %v264 = vmul.f32 %v231, %v249
        %v265 = vmul.f32 %v232, %v249
        %v266 = vmul.f32 %v233, %v249
        %v267 = vmul.f32 %v234, %v249
        %v268 = vmul.f32 %v235, %v249
        %v269 = vmul.f32 %v236, %v249
        %v270 = vmul.f32 %v237, %v249
        %v271 = vmul.f32 %v238, %v249
        %v272 = vmul.f32 %v239, %v249
        %v273 = vmul.f32 %v240, %v249
        %v274 = vmul.f32 %v241, %v249
        %v275 = vmul.f32 %v242, %v249
        %v276 = vmul.f32 %v243, %v249
        %v277 = vld [vmem:[%s2] sm:$0x1]
        %v279 = vlaneseq
        %v280 = vshrl.u32 %v279, 7
        %v281 = vsub.s32 0, %v280
        %v282 = vrot.slane %v277, %v281
        %v284 = vadd.f32 %v251, %v282
        %v285 = vadd.f32 %v252, %v282
        %v286 = vadd.f32 %v253, %v282
        %v287 = vadd.f32 %v254, %v282
        %v288 = vadd.f32 %v255, %v282
        %v289 = vadd.f32 %v256, %v282
        %v290 = vadd.f32 %v257, %v282
        %v291 = vadd.f32 %v258, %v282
        %v292 = vadd.f32 %v259, %v282
        %v293 = vadd.f32 %v260, %v282
        %v294 = vadd.f32 %v261, %v282
        %v295 = vadd.f32 %v262, %v282
        %v296 = vadd.f32 %v263, %v282
        %v297 = vadd.f32 %v264, %v282
        %v298 = vadd.f32 %v265, %v282
        %v299 = vadd.f32 %v266, %v282
        %v300 = vadd.f32 %v267, %v282
        %v301 = vadd.f32 %v268, %v282
        %v302 = vadd.f32 %v269, %v282
        %v303 = vadd.f32 %v270, %v282
        %v304 = vadd.f32 %v271, %v282
        %v305 = vadd.f32 %v272, %v282
        %v306 = vadd.f32 %v273, %v282
        %v307 = vadd.f32 %v274, %v282
        %v308 = vadd.f32 %v275, %v282
        %v309 = vadd.f32 %v276, %v282
        %v310 = vmax.f32 %v284, 0.0
        %v311 = vmax.f32 %v285, 0.0
        %v312 = vmax.f32 %v286, 0.0
        %v313 = vmax.f32 %v287, 0.0
        %v314 = vmax.f32 %v288, 0.0
        %v315 = vmax.f32 %v289, 0.0
        %v316 = vmax.f32 %v290, 0.0
        %v317 = vmax.f32 %v291, 0.0
        %v318 = vmax.f32 %v292, 0.0
        %v319 = vmax.f32 %v293, 0.0
        %v320 = vmax.f32 %v294, 0.0
        %v321 = vmax.f32 %v295, 0.0
        %v322 = vmax.f32 %v296, 0.0
        %v323 = vmax.f32 %v297, 0.0
        %v324 = vmax.f32 %v298, 0.0
        %v325 = vmax.f32 %v299, 0.0
        %v326 = vmax.f32 %v300, 0.0
        %v327 = vmax.f32 %v301, 0.0
        %v328 = vmax.f32 %v302, 0.0
        %v329 = vmax.f32 %v303, 0.0
        %v330 = vmax.f32 %v304, 0.0
        %v331 = vmax.f32 %v305, 0.0
        %v332 = vmax.f32 %v306, 0.0
        %v333 = vmax.f32 %v307, 0.0
        %v334 = vmax.f32 %v308, 0.0
        %v335 = vmax.f32 %v309, 0.0
        %336 = vst [vmem:[%s172] sm:$0xff] %v310
        %337 = vst [vmem:[%s172 + $0x8] sm:$0xff] %v311
        %338 = vst [vmem:[%s172 + $0x10] sm:$0xff] %v312
        %339 = vst [vmem:[%s172 + $0x18] sm:$0xff] %v313
        %340 = vst [vmem:[%s172 + $0x20] sm:$0xff] %v314
        %341 = vst [vmem:[%s172 + $0x28] sm:$0xff] %v315
        %342 = vst [vmem:[%s172 + $0x30] sm:$0xff] %v316
        %343 = vst [vmem:[%s172 + $0x38] sm:$0xff] %v317
        %344 = vst [vmem:[%s172 + $0x40] sm:$0xff] %v318
        %345 = vst [vmem:[%s172 + $0x48] sm:$0xff] %v319
        %346 = vst [vmem:[%s172 + $0x50] sm:$0xff] %v320
        %347 = vst [vmem:[%s172 + $0x58] sm:$0xff] %v321
        %348 = vst [vmem:[%s172 + $0x60] sm:$0xff] %v322
        %349 = vst [vmem:[%s172 + $0x68] sm:$0xff] %v323
        %350 = vst [vmem:[%s172 + $0x70] sm:$0xff] %v324
        %351 = vst [vmem:[%s172 + $0x78] sm:$0xff] %v325
        %352 = vst [vmem:[%s172 + $0x80] sm:$0xff] %v326
        %353 = vst [vmem:[%s172 + $0x88] sm:$0xff] %v327
        %354 = vst [vmem:[%s172 + $0x90] sm:$0xff] %v328
        %355 = vst [vmem:[%s172 + $0x98] sm:$0xff] %v329
        %356 = vst [vmem:[%s172 + $0xa0] sm:$0xff] %v330
        %357 = vst [vmem:[%s172 + $0xa8] sm:$0xff] %v331
        %358 = vst [vmem:[%s172 + $0xb0] sm:$0xff] %v332
        %359 = vst [vmem:[%s172 + $0xb8] sm:$0xff] %v333
        %360 = vst [vmem:[%s172 + $0xc0] sm:$0xff] %v334
        %361 = vst [vmem:[%s172 + $0xc8] sm:$0xff] %v335
        %s362 = sand.u32 %s90, 1
        %s363 = sand.u32 %s90, 1
        %s364 = smul.addr %s363, 208
        %s365 = scalar_lea.vmem [#allocation2], %s364
        // Predicated region
        $region33: #{conv_bn_relu.3} parent=31 // pred_check
          %p366 = pneg %p100
        $region34: #{conv_bn_relu.3} parent=31 // pred_check_branch
          %368 = sbr.rel (%p366) target = $region36
        $region35: #{conv_bn_relu.3} parent=31 // pred_region
          %s369 = smul.u32 26, %s14
          %s370 = ssub.s32 49, %s369
          %p371 = scmp.lt.s32.totalorder %s370, 26
          %s372 = scalar_select %p371, %s370, 26
          %s373 = smul.u32 128, %s372
          %p374 = scmp.ne.s32.totalorder 0, %s373
          %s375 = smul.addr %s369, 8
          %s376 = scalar_lea.vmem %s3, %s375
          // Predicated region
          $region37: #{conv_bn_relu.3} parent=35 // pred_check
            %p377 = pneg %p374
          $region38: #{conv_bn_relu.3} parent=35 // pred_check_branch
            %379 = sbr.rel (%p377) target = $region40
          $region39: #{conv_bn_relu.3} parent=35 // pred_region
            // Predicated region
            $region41: #{conv_bn_relu.3} parent=39 // pred_check
              _
            $region42: #{conv_bn_relu.3} parent=39 // pred_check_branch
              %381 = sbr.rel (0) target = $region44
            $region43: #{conv_bn_relu.3} parent=39 // pred_region
              // Predicated region
              $region63: #{conv_bn_relu.3} parent=43 // pred_check
                _
              $region64: #{conv_bn_relu.3} parent=43 // pred_check_branch
                %482 = sbr.rel (0) target = $region66
              $region65: #{conv_bn_relu.3} parent=43 // pred_region
                %s483 = sdiv.u32.pop %s372, 26
                %s484 = srem.u32.pop %s372, 26
                // While loop
                $region67: #{conv_bn_relu.3} parent=65 // loop_pre_header
                  _
                $region68: #{conv_bn_relu.3} parent=65 // loop_header
                  %s486 = sphi 0, %s488
                  %p487 = scmp.ge.s32.totalorder %s486, %s483
                  %s491 = sphi 0, %s548
                  %s492 = sphi %s365, %s551
                  %s493 = sphi %s376, %s552
                $region69: #{conv_bn_relu.3} parent=65 // loop_header_branch
                  %490 = sbr.rel (%p487) target = $region73
                $region70: #{conv_bn_relu.3} parent=65 // loop_body
                  %v494 = vld [vmem:[%s492] sm:$0xff]
                  %495 = vst [vmem:[%s493] sm:$0xff] %v494
                  %v496 = vld [vmem:[%s492 + $0x8] sm:$0xff]
                  %497 = vst [vmem:[%s493 + $0x8] sm:$0xff] %v496
                  %v498 = vld [vmem:[%s492 + $0x10] sm:$0xff]
                  %499 = vst [vmem:[%s493 + $0x10] sm:$0xff] %v498
                  %v500 = vld [vmem:[%s492 + $0x18] sm:$0xff]
                  %501 = vst [vmem:[%s493 + $0x18] sm:$0xff] %v500
                  %v502 = vld [vmem:[%s492 + $0x20] sm:$0xff]
                  %503 = vst [vmem:[%s493 + $0x20] sm:$0xff] %v502
                  %v504 = vld [vmem:[%s492 + $0x28] sm:$0xff]
                  %505 = vst [vmem:[%s493 + $0x28] sm:$0xff] %v504
                  %v506 = vld [vmem:[%s492 + $0x30] sm:$0xff]
                  %507 = vst [vmem:[%s493 + $0x30] sm:$0xff] %v506
                  %v508 = vld [vmem:[%s492 + $0x38] sm:$0xff]
                  %509 = vst [vmem:[%s493 + $0x38] sm:$0xff] %v508
                  %v510 = vld [vmem:[%s492 + $0x40] sm:$0xff]
                  %511 = vst [vmem:[%s493 + $0x40] sm:$0xff] %v510
                  %v512 = vld [vmem:[%s492 + $0x48] sm:$0xff]
                  %513 = vst [vmem:[%s493 + $0x48] sm:$0xff] %v512
                  %v514 = vld [vmem:[%s492 + $0x50] sm:$0xff]
                  %515 = vst [vmem:[%s493 + $0x50] sm:$0xff] %v514
                  %v516 = vld [vmem:[%s492 + $0x58] sm:$0xff]
                  %517 = vst [vmem:[%s493 + $0x58] sm:$0xff] %v516
                  %v518 = vld [vmem:[%s492 + $0x60] sm:$0xff]
                  %519 = vst [vmem:[%s493 + $0x60] sm:$0xff] %v518
                  %v520 = vld [vmem:[%s492 + $0x68] sm:$0xff]
                  %521 = vst [vmem:[%s493 + $0x68] sm:$0xff] %v520
                  %v522 = vld [vmem:[%s492 + $0x70] sm:$0xff]
                  %523 = vst [vmem:[%s493 + $0x70] sm:$0xff] %v522
                  %v524 = vld [vmem:[%s492 + $0x78] sm:$0xff]
                  %525 = vst [vmem:[%s493 + $0x78] sm:$0xff] %v524
                  %v526 = vld [vmem:[%s492 + $0x80] sm:$0xff]
                  %527 = vst [vmem:[%s493 + $0x80] sm:$0xff] %v526
                  %v528 = vld [vmem:[%s492 + $0x88] sm:$0xff]
                  %529 = vst [vmem:[%s493 + $0x88] sm:$0xff] %v528
                  %v530 = vld [vmem:[%s492 + $0x90] sm:$0xff]
                  %531 = vst [vmem:[%s493 + $0x90] sm:$0xff] %v530
                  %v532 = vld [vmem:[%s492 + $0x98] sm:$0xff]
                  %533 = vst [vmem:[%s493 + $0x98] sm:$0xff] %v532
                  %v534 = vld [vmem:[%s492 + $0xa0] sm:$0xff]
                  %535 = vst [vmem:[%s493 + $0xa0] sm:$0xff] %v534
                  %v536 = vld [vmem:[%s492 + $0xa8] sm:$0xff]
                  %537 = vst [vmem:[%s493 + $0xa8] sm:$0xff] %v536
                  %v538 = vld [vmem:[%s492 + $0xb0] sm:$0xff]
                  %539 = vst [vmem:[%s493 + $0xb0] sm:$0xff] %v538
                  %v540 = vld [vmem:[%s492 + $0xb8] sm:$0xff]
                  %541 = vst [vmem:[%s493 + $0xb8] sm:$0xff] %v540
                  %v542 = vld [vmem:[%s492 + $0xc0] sm:$0xff]
                  %543 = vst [vmem:[%s493 + $0xc0] sm:$0xff] %v542
                  %v544 = vld [vmem:[%s492 + $0xc8] sm:$0xff]
                  %545 = vst [vmem:[%s493 + $0xc8] sm:$0xff] %v544
                  %s546 = sadd.s32 1, %s491
                  %p547 = scmp.ge.s32.totalorder %s546, %s483
                  %s548 = scalar_select %p547, 0, %s546
                  %s549 = smul.u32 %s548, 208
                  %s550 = smul.u32 %s548, 208
                  %s551 = scalar_lea.vmem %s365, %s549 [#allocation2]
                  %s552 = scalar_lea.vmem %s376, %s550
                $region71: #{conv_bn_relu.3} parent=65 // loop_footer
                  %s488 = sadd.s32 %s486, 1
                $region72: #{conv_bn_relu.3} parent=65 // loop_footer_branch
                  %485 = sbr.rel target = $region68
                $region73: #{conv_bn_relu.3} parent=65 // loop_exit
                  _
                %s553 = sdiv.u32.pop %s372, 26
                %s554 = srem.u32.pop %s372, 26
                %s555 = smul.u32 %s553, 26
                %s556 = smul.u32 8, %s555
                %s557 = scalar_lea.vmem %s365, %s556 [#allocation2]
                %s558 = smul.u32 8, %s555
                %s559 = scalar_lea.vmem %s376, %s558
                // While loop
                $region74: #{conv_bn_relu.3} parent=65 // loop_pre_header
                  _
                $region75: #{conv_bn_relu.3} parent=65 // loop_header
                  %s561 = sphi 0, %s563
                  %p562 = scmp.ge.s32.totalorder %s561, %s554
                  %s566 = sphi 0, %s573
                  %s567 = sphi %s557, %s576
                  %s568 = sphi %s559, %s577
                $region76: #{conv_bn_relu.3} parent=65 // loop_header_branch
                  %565 = sbr.rel (%p562) target = $region80
                $region77: #{conv_bn_relu.3} parent=65 // loop_body
                  %v569 = vld [vmem:[%s567] sm:$0xff]
                  %570 = vst [vmem:[%s568] sm:$0xff] %v569
                  %s571 = sadd.s32 1, %s566
                  %p572 = scmp.ge.s32.totalorder %s571, %s554
                  %s573 = scalar_select %p572, 0, %s571
                  %s574 = smul.u32 %s573, 8
                  %s575 = smul.u32 %s573, 8
                  %s576 = scalar_lea.vmem %s557, %s574 [#allocation2]
                  %s577 = scalar_lea.vmem %s559, %s575
                $region78: #{conv_bn_relu.3} parent=65 // loop_footer
                  %s563 = sadd.s32 %s561, 1
                $region79: #{conv_bn_relu.3} parent=65 // loop_footer_branch
                  %560 = sbr.rel target = $region75
                $region80: #{conv_bn_relu.3} parent=65 // loop_exit
                  _
              $region66: #{conv_bn_relu.3} parent=43 // pred_fallthru
                _
              // Predicated region
              $region81: #{conv_bn_relu.3} parent=43 // pred_check
                _
              $region82: #{conv_bn_relu.3} parent=43 // pred_check_branch
                %579 = sbr.rel target = $region84
              $region83: #{conv_bn_relu.3} parent=43 // pred_region
                _
              $region84: #{conv_bn_relu.3} parent=43 // pred_fallthru
                _
            $region44: #{conv_bn_relu.3} parent=39 // pred_fallthru
              _
            // Predicated region
            $region45: #{conv_bn_relu.3} parent=39 // pred_check
              _
            $region46: #{conv_bn_relu.3} parent=39 // pred_check_branch
              %383 = sbr.rel target = $region48
            $region47: #{conv_bn_relu.3} parent=39 // pred_region
              %s385 = ssub.s32 256, 1
              %s386 = sdiv.u32.pop %s372, 26
              %s387 = srem.u32.pop %s372, 26
              // While loop
              $region49: #{conv_bn_relu.3} parent=47 // loop_pre_header
                _
              $region50: #{conv_bn_relu.3} parent=47 // loop_header
                %s389 = sphi 0, %s391
                %p390 = scmp.ge.s32.totalorder %s389, %s386
                %s394 = sphi 0, %s451
                %s395 = sphi %s365, %s454
                %s396 = sphi %s376, %s455
              $region51: #{conv_bn_relu.3} parent=47 // loop_header_branch
                %393 = sbr.rel (%p390) target = $region55
              $region52: #{conv_bn_relu.3} parent=47 // loop_body
                %v397 = vld [vmem:[%s395] sm:%s385]
                %398 = vst [vmem:[%s396] sm:%s385] %v397
                %v399 = vld [vmem:[%s395 + $0x8] sm:%s385]
                %400 = vst [vmem:[%s396 + $0x8] sm:%s385] %v399
                %v401 = vld [vmem:[%s395 + $0x10] sm:%s385]
                %402 = vst [vmem:[%s396 + $0x10] sm:%s385] %v401
                %v403 = vld [vmem:[%s395 + $0x18] sm:%s385]
                %404 = vst [vmem:[%s396 + $0x18] sm:%s385] %v403
                %v405 = vld [vmem:[%s395 + $0x20] sm:%s385]
                %406 = vst [vmem:[%s396 + $0x20] sm:%s385] %v405
                %v407 = vld [vmem:[%s395 + $0x28] sm:%s385]
                %408 = vst [vmem:[%s396 + $0x28] sm:%s385] %v407
                %v409 = vld [vmem:[%s395 + $0x30] sm:%s385]
                %410 = vst [vmem:[%s396 + $0x30] sm:%s385] %v409
                %v411 = vld [vmem:[%s395 + $0x38] sm:%s385]
                %412 = vst [vmem:[%s396 + $0x38] sm:%s385] %v411
                %v413 = vld [vmem:[%s395 + $0x40] sm:%s385]
                %414 = vst [vmem:[%s396 + $0x40] sm:%s385] %v413
                %v415 = vld [vmem:[%s395 + $0x48] sm:%s385]
                %416 = vst [vmem:[%s396 + $0x48] sm:%s385] %v415
                %v417 = vld [vmem:[%s395 + $0x50] sm:%s385]
                %418 = vst [vmem:[%s396 + $0x50] sm:%s385] %v417
                %v419 = vld [vmem:[%s395 + $0x58] sm:%s385]
                %420 = vst [vmem:[%s396 + $0x58] sm:%s385] %v419
                %v421 = vld [vmem:[%s395 + $0x60] sm:%s385]
                %422 = vst [vmem:[%s396 + $0x60] sm:%s385] %v421
                %v423 = vld [vmem:[%s395 + $0x68] sm:%s385]
                %424 = vst [vmem:[%s396 + $0x68] sm:%s385] %v423
                %v425 = vld [vmem:[%s395 + $0x70] sm:%s385]
                %426 = vst [vmem:[%s396 + $0x70] sm:%s385] %v425
                %v427 = vld [vmem:[%s395 + $0x78] sm:%s385]
                %428 = vst [vmem:[%s396 + $0x78] sm:%s385] %v427
                %v429 = vld [vmem:[%s395 + $0x80] sm:%s385]
                %430 = vst [vmem:[%s396 + $0x80] sm:%s385] %v429
                %v431 = vld [vmem:[%s395 + $0x88] sm:%s385]
                %432 = vst [vmem:[%s396 + $0x88] sm:%s385] %v431
                %v433 = vld [vmem:[%s395 + $0x90] sm:%s385]
                %434 = vst [vmem:[%s396 + $0x90] sm:%s385] %v433
                %v435 = vld [vmem:[%s395 + $0x98] sm:%s385]
                %436 = vst [vmem:[%s396 + $0x98] sm:%s385] %v435
                %v437 = vld [vmem:[%s395 + $0xa0] sm:%s385]
                %438 = vst [vmem:[%s396 + $0xa0] sm:%s385] %v437
                %v439 = vld [vmem:[%s395 + $0xa8] sm:%s385]
                %440 = vst [vmem:[%s396 + $0xa8] sm:%s385] %v439
                %v441 = vld [vmem:[%s395 + $0xb0] sm:%s385]
                %442 = vst [vmem:[%s396 + $0xb0] sm:%s385] %v441
                %v443 = vld [vmem:[%s395 + $0xb8] sm:%s385]
                %444 = vst [vmem:[%s396 + $0xb8] sm:%s385] %v443
                %v445 = vld [vmem:[%s395 + $0xc0] sm:%s385]
                %446 = vst [vmem:[%s396 + $0xc0] sm:%s385] %v445
                %v447 = vld [vmem:[%s395 + $0xc8] sm:%s385]
                %448 = vst [vmem:[%s396 + $0xc8] sm:%s385] %v447
                %s449 = sadd.s32 1, %s394
                %p450 = scmp.ge.s32.totalorder %s449, %s386
                %s451 = scalar_select %p450, 0, %s449
                %s452 = smul.u32 %s451, 208
                %s453 = smul.u32 %s451, 208
                %s454 = scalar_lea.vmem %s365, %s452 [#allocation2]
                %s455 = scalar_lea.vmem %s376, %s453
              $region53: #{conv_bn_relu.3} parent=47 // loop_footer
                %s391 = sadd.s32 %s389, 1
              $region54: #{conv_bn_relu.3} parent=47 // loop_footer_branch
                %388 = sbr.rel target = $region50
              $region55: #{conv_bn_relu.3} parent=47 // loop_exit
                _
              %s456 = sdiv.u32.pop %s372, 26
              %s457 = srem.u32.pop %s372, 26
              %s458 = smul.u32 %s456, 26
              %s459 = smul.u32 8, %s458
              %s460 = scalar_lea.vmem %s365, %s459 [#allocation2]
              %s461 = smul.u32 8, %s458
              %s462 = scalar_lea.vmem %s376, %s461
              // While loop
              $region56: #{conv_bn_relu.3} parent=47 // loop_pre_header
                _
              $region57: #{conv_bn_relu.3} parent=47 // loop_header
                %s464 = sphi 0, %s466
                %p465 = scmp.ge.s32.totalorder %s464, %s457
                %s469 = sphi 0, %s476
                %s470 = sphi %s460, %s479
                %s471 = sphi %s462, %s480
              $region58: #{conv_bn_relu.3} parent=47 // loop_header_branch
                %468 = sbr.rel (%p465) target = $region62
              $region59: #{conv_bn_relu.3} parent=47 // loop_body
                %v472 = vld [vmem:[%s470] sm:%s385]
                %473 = vst [vmem:[%s471] sm:%s385] %v472
                %s474 = sadd.s32 1, %s469
                %p475 = scmp.ge.s32.totalorder %s474, %s457
                %s476 = scalar_select %p475, 0, %s474
                %s477 = smul.u32 %s476, 8
                %s478 = smul.u32 %s476, 8
                %s479 = scalar_lea.vmem %s460, %s477 [#allocation2]
                %s480 = scalar_lea.vmem %s462, %s478
              $region60: #{conv_bn_relu.3} parent=47 // loop_footer
                %s466 = sadd.s32 %s464, 1
              $region61: #{conv_bn_relu.3} parent=47 // loop_footer_branch
                %463 = sbr.rel target = $region57
              $region62: #{conv_bn_relu.3} parent=47 // loop_exit
                _
            $region48: #{conv_bn_relu.3} parent=39 // pred_fallthru
              _
          $region40: #{conv_bn_relu.3} parent=35 // pred_fallthru
            _
          %580 = vnop
        $region36: #{conv_bn_relu.3} parent=31 // pred_fallthru
          _
      $region32: #{conv_bn_relu.3} parent=5 // pred_fallthru
        _
      %p581 = scmp.le.s32.totalorder 2, %s9
      // Predicated region
      $region85: #{conv_bn_relu.3} parent=5 // pred_check
        %p582 = pneg %p581
      $region86: #{conv_bn_relu.3} parent=5 // pred_check_branch
        %584 = sbr.rel (%p582) target = $region88
      $region87: #{conv_bn_relu.3} parent=5 // pred_region
        %s585 = ssub.s32 %s9, 2
        // Predicated region
        $region89: #{conv_bn_relu.3} parent=87 // pred_check
          %p586 = pneg %p106
        $region90: #{conv_bn_relu.3} parent=87 // pred_check_branch
          %588 = sbr.rel (%p586) target = $region92
        $region91: #{conv_bn_relu.3} parent=87 // pred_region
          %s589 = sand.u32 %s91, 1
          %s590 = sand.u32 %s91, 1
          %s591 = smul.addr %s590, 208
          %s592 = scalar_lea.vmem [#allocation2], %s591
        $region92: #{conv_bn_relu.3} parent=87 // pred_fallthru
          _
      $region88: #{conv_bn_relu.3} parent=5 // pred_fallthru
        _
    $region6: #{conv_bn_relu.3} parent=1 // loop_footer
      %s13 = sadd.s32 1, %s9
    $region7: #{conv_bn_relu.3} parent=1 // loop_footer_branch
      %8 = sbr.rel target = $region3
    $region8: #{conv_bn_relu.3} parent=1 // loop_exit
      _

// kernel: conv_bn_relu.2
$region0: #{conv_bn_relu.2}
  #allocation0 [shape = 'u32[]', space=smem, size = 0x4, offset = 0x4, fixed_abs, tag = 'smem constant byte address 0x4 - core index']
  #allocation1 [shape = 'u32[144,128]{1,0:T(1,128)}', space=vmem, size = 0x12000, scoped, tag = 'internal scratch']
  %s0 = inlined_call_operand.vmem [shape: bf16[392,36], index: 0, kind: input, shape index: {}]
  %s1 = inlined_call_operand.vmem [shape: bf16[36,128], index: 1, kind: input, shape index: {}]
  %s2 = inlined_call_operand.vmem [shape: bf16[392,128], index: 2, kind: output, shape index: {0}]
  %s3 = inlined_call_operand.vmem [shape: f32[2,8,128], index: 3, kind: output, shape index: {1}]
  %s4 = inlined_call_operand.vmem [shape: f32[2,8,128], index: 4, kind: output, shape index: {2}]
  %5 = xla_tuple %s2, %s3, %s4
  %s6 = sld [smem:[#allocation0]]
  $region101: #{conv_bn_relu.2} parent=0
    _
  %s8 = ssub.s32 1, %s6
  %s9 = scalar_select 0, %s8, %s6
  $region1: #{conv_bn_relu.2} parent=0
    #allocation2 [shape = 'u8[106496]{0}', space=vmem, size = 0x1a000, scoped, tag = 'output window, operand 0']
    loop: start=0, step=1, limit=4
    $region2: #{conv_bn_relu.2} parent=1 // loop_pre_header
      _
    $region3: #{conv_bn_relu.2} parent=1 // loop_header
      %s11 = sphi 0, %s15
      %p12 = scmp.ge.s32.totalorder %s11, 4
      %s21 = sphi 0, %s23
      %s24 = sphi 0, %s21
      %s25 = sphi 0, %s24
      %s41 = sphi 0, %s25
      %s45 = sphi 0, %s45
      %s47 = sphi 0, %s45
      %s48 = sphi 0, %s47
      %s62 = sphi 0, %s48
      %s68 = sphi 0, %s70
      %s71 = sphi 0, %s68
      %s72 = sphi 0, %s71
      %s88 = sphi 0, %s72
      %s94 = sphi 0, %s96
      %s97 = sphi 0, %s94
      %s98 = sphi 0, %s97
      %s114 = sphi 0, %s98
      %s120 = sphi 0, %s122
      %s123 = sphi 0, %s120
      %s124 = sphi 0, %s123
      %s140 = sphi 0, %s124
    $region4: #{conv_bn_relu.2} parent=1 // loop_header_branch
      %14 = sbr.rel (%p12) target = $region8
    $region5: #{conv_bn_relu.2} parent=1 // loop_body
      %s16 = ssub.s32 %s11, 1
      %s17 = ssub.s32 %s11, 2
      %s18 = sadd.s32 %s11, 1
      %s19 = ssub.s32 %s11, %s18
      %p20 = scmp.eq.s32.totalorder %s19, 0
      %s22 = sadd.s32 %s21, 1
      %s23 = scalar_select %p20, %s21, %s22
      %p26 = pneg %p20
      %p27 = scmp.eq.s32.totalorder %s11, 1
      %p28 = por %p26, %p27
      %p29 = scmp.ne.s32.totalorder %s21, %s24
      %p30 = scmp.eq.s32.totalorder %s11, 0
      %p31 = por %p29, %p30
      %p32 = scmp.ne.s32.totalorder %s21, %s24
      %p33 = scmp.eq.s32.totalorder %s16, 1
      %p34 = por %p32, %p33
      %p35 = scmp.ne.s32.totalorder %s24, %s25
      %p36 = scmp.eq.s32.totalorder %s16, 0
      %p37 = por %p35, %p36
      %p38 = scmp.ne.s32.totalorder %s24, %s25
      %p39 = scmp.eq.s32.totalorder %s17, 1
      %p40 = por %p38, %p39
      %p42 = scmp.ne.s32.totalorder %s25, %s41
      %p43 = scmp.eq.s32.totalorder %s17, 0
      %p44 = por %p42, %p43
      %s46 = sadd.s32 %s45, 1
      %p49 = scmp.eq.s32.totalorder %s11, 1
      %p50 = scmp.ne.s32.totalorder %s45, %s47
      %p51 = scmp.eq.s32.totalorder %s11, 0
      %p52 = por %p50, %p51
      %p53 = scmp.ne.s32.totalorder %s45, %s47
      %p54 = scmp.eq.s32.totalorder %s16, 1
      %p55 = por %p53, %p54
      %p56 = scmp.ne.s32.totalorder %s47, %s48
      %p57 = scmp.eq.s32.totalorder %s16, 0
      %p58 = por %p56, %p57
      %p59 = scmp.ne.s32.totalorder %s47, %s48
      %p60 = scmp.eq.s32.totalorder %s17, 1
      %p61 = por %p59, %p60
      %p63 = scmp.ne.s32.totalorder %s48, %s62
      %p64 = scmp.eq.s32.totalorder %s17, 0
      %p65 = por %p63, %p64
      %s66 = ssub.s32 %s11, %s18
      %p67 = scmp.eq.s32.totalorder %s66, 0
      %s69 = sadd.s32 %s68, 1
      %s70 = scalar_select %p67, %s68, %s69
      %p73 = pneg %p67
      %p74 = scmp.eq.s32.totalorder %s11, 1
      %p75 = por %p73, %p74
      %p76 = scmp.ne.s32.totalorder %s68, %s71
      %p77 = scmp.eq.s32.totalorder %s11, 0
      %p78 = por %p76, %p77
      %p79 = scmp.ne.s32.totalorder %s68, %s71
      %p80 = scmp.eq.s32.totalorder %s16, 1
      %p81 = por %p79, %p80
      %p82 = scmp.ne.s32.totalorder %s71, %s72
      %p83 = scmp.eq.s32.totalorder %s16, 0
      %p84 = por %p82, %p83
      %p85 = scmp.ne.s32.totalorder %s71, %s72
      %p86 = scmp.eq.s32.totalorder %s17, 1
      %p87 = por %p85, %p86
      %p89 = scmp.ne.s32.totalorder %s72, %s88
      %p90 = scmp.eq.s32.totalorder %s17, 0
      %p91 = por %p89, %p90
      %s92 = ssub.s32 %s11, %s18
      %p93 = scmp.eq.s32.totalorder %s92, 0
      %s95 = sadd.s32 %s94, 1
      %s96 = scalar_select %p93, %s94, %s95
      %p99 = pneg %p93
      %p100 = scmp.eq.s32.totalorder %s11, 1
      %p101 = por %p99, %p100
      %p102 = scmp.ne.s32.totalorder %s94, %s97
      %p103 = scmp.eq.s32.totalorder %s11, 0
      %p104 = por %p102, %p103
      %p105 = scmp.ne.s32.totalorder %s94, %s97
      %p106 = scmp.eq.s32.totalorder %s16, 1
      %p107 = por %p105, %p106
      %p108 = scmp.ne.s32.totalorder %s97, %s98
      %p109 = scmp.eq.s32.totalorder %s16, 0
      %p110 = por %p108, %p109
      %p111 = scmp.ne.s32.totalorder %s97, %s98
      %p112 = scmp.eq.s32.totalorder %s17, 1
      %p113 = por %p111, %p112
      %p115 = scmp.ne.s32.totalorder %s98, %s114
      %p116 = scmp.eq.s32.totalorder %s17, 0
      %p117 = por %p115, %p116
      %s118 = ssub.s32 %s11, %s18
      %p119 = scmp.eq.s32.totalorder %s118, 0
      %s121 = sadd.s32 %s120, 1
      %s122 = scalar_select %p119, %s120, %s121
      %p125 = pneg %p119
      %p126 = scmp.eq.s32.totalorder %s11, 1
      %p127 = por %p125, %p126
      %p128 = scmp.ne.s32.totalorder %s120, %s123
      %p129 = scmp.eq.s32.totalorder %s11, 0
      %p130 = por %p128, %p129
      %p131 = scmp.ne.s32.totalorder %s120, %s123
      %p132 = scmp.eq.s32.totalorder %s16, 1
      %p133 = por %p131, %p132
      %p134 = scmp.ne.s32.totalorder %s123, %s124
      %p135 = scmp.eq.s32.totalorder %s16, 0
      %p136 = por %p134, %p135
      %p137 = scmp.ne.s32.totalorder %s123, %s124
      %p138 = scmp.eq.s32.totalorder %s17, 1
      %p139 = por %p137, %p138
      %p141 = scmp.ne.s32.totalorder %s124, %s140
      %p142 = scmp.eq.s32.totalorder %s17, 0
      %p143 = por %p141, %p142
      %p144 = scmp.le.s32.totalorder 1, %s11
      %p145 = scmp.lt.s32.totalorder %s11, 3
      %p146 = pnand %p144, %p145
      %p147 = pneg %p146
      // Predicated region
      $region9: #{conv_bn_relu.2} parent=5 // pred_check
        _
      $region10: #{conv_bn_relu.2} parent=5 // pred_check_branch
        %149 = sbr.rel (%p146) target = $region12
      $region11: #{conv_bn_relu.2} parent=5 // pred_region
        %s150 = ssub.s32 %s11, 1
        // Predicated region
        $region13: #{conv_bn_relu.2} parent=11 // pred_check
          %p151 = pneg %p58
        $region14: #{conv_bn_relu.2} parent=11 // pred_check_branch
          %153 = sbr.rel (%p151) target = $region16
        $region15: #{conv_bn_relu.2} parent=11 // pred_region
          _
        $region16: #{conv_bn_relu.2} parent=11 // pred_fallthru
          _
      $region12: #{conv_bn_relu.2} parent=5 // pred_fallthru
        _
      %p154 = scmp.lt.s32.totalorder %s11, 2
      // Predicated region
      $region17: #{conv_bn_relu.2} parent=5 // pred_check
        %p155 = pneg %p154
      $region18: #{conv_bn_relu.2} parent=5 // pred_check_branch
        %157 = sbr.rel (%p155) target = $region20
      $region19: #{conv_bn_relu.2} parent=5 // pred_region
        // Predicated region
        $region21: #{conv_bn_relu.2} parent=19 // pred_check
          %p158 = pneg %p31
        $region22: #{conv_bn_relu.2} parent=19 // pred_check_branch
          %160 = sbr.rel (%p158) target = $region24
        $region23: #{conv_bn_relu.2} parent=19 // pred_region
          %s161 = smul.u32 26, %s11
          %s162 = ssub.s32 49, %s161
          %p163 = scmp.lt.s32.totalorder %s162, 26
          %s164 = scalar_select %p163, %s162, 26
          %s165 = smul.u32 64, %s164
          %p166 = scmp.lt.s32.totalorder %s161, 48
          %s167 = scalar_select %p166, %s161, 48
          %s168 = smul.addr %s167, 4
          %s169 = scalar_lea.vmem %s0, %s168
          %s170 = smul.u32 26, %s11
          %s171 = ssub.s32 49, %s170
          %p172 = scmp.lt.s32.totalorder %s171, 26
          %s173 = scalar_select %p172, %s171, 26
          %s174 = smul.u32 64, %s173
        $region24: #{conv_bn_relu.2} parent=19 // pred_fallthru
          _
      $region20: #{conv_bn_relu.2} parent=5 // pred_fallthru
        _
      %p175 = scmp.le.s32.totalorder 1, %s11
      %p176 = scmp.lt.s32.totalorder %s11, 3
      %p177 = pnand %p175, %p176
      %p178 = pneg %p177
      // Predicated region
      $region25: #{conv_bn_relu.2} parent=5 // pred_check
        _
      $region26: #{conv_bn_relu.2} parent=5 // pred_check_branch
        %180 = sbr.rel (%p177) target = $region28
      $region27: #{conv_bn_relu.2} parent=5 // pred_region
        %s181 = ssub.s32 %s11, 1
        %s182 = smul.u32 26, %s16
        %s183 = ssub.s32 49, %s182
        %p184 = scmp.lt.s32.totalorder %s183, 26
        %s185 = scalar_select %p184, %s183, 26
        %s186 = smul.u32 64, %s185
        %p187 = scmp.lt.s32.totalorder %s182, 48
        %s188 = scalar_select %p187, %s182, 48
        %s189 = smul.addr %s188, 4
        %s190 = scalar_lea.vmem %s0, %s189
        %p191 = pneg %p37
        %p192 = pneg %p34
        %p193 = pneg %p58
        %p194 = pneg %p55
        %p195 = pneg %p84
        %p196 = pneg %p81
        %s197 = sand.u32 %s71, 1
        %s198 = sand.u32 %s71, 1
        %s199 = smul.addr %s198, 104
        %s200 = scalar_lea.vmem [#allocation2], %s199
        %p201 = pneg %p110
        %p202 = pneg %p107
        %p203 = scmp.lt.s32.totalorder %s16, 1
        %s204 = scalar_select %p203, %s16, 1
        %s205 = smul.addr %s204, 8
        %s206 = scalar_lea.vmem %s3, %s205
        %p207 = pneg %p136
        %p208 = pneg %p133
        %p209 = scmp.lt.s32.totalorder %s16, 1
        %s210 = scalar_select %p209, %s16, 1
        %s211 = smul.addr %s210, 8
        %s212 = scalar_lea.vmem %s4, %s211
        %s213 = smul.u32 26, %s16
        %s214 = ssub.s32 49, %s213
        %p215 = scmp.lt.s32.totalorder %s214, 26
        %s216 = scalar_select %p215, %s214, 26
        %s217 = smul.u32 64, %s216
        %p218 = scmp.lt.s32.totalorder %s213, 48
        %s219 = scalar_select %p218, %s213, 48
        %s220 = smul.addr %s219, 4
        %s221 = scalar_lea.vmem %s0, %s220
        %s222 = smul.u32 26, %s16
        %s223 = ssub.s32 49, %s222
        %p224 = scmp.lt.s32.totalorder %s223, 26
        %s225 = scalar_select %p224, %s223, 26
        %s226 = smul.u32 64, %s225
        %s227 = smul.u32 26, %s16
        %s228 = ssub.s32 49, %s227
        %p229 = scmp.lt.s32.totalorder %s228, 26
        %s230 = scalar_select %p229, %s228, 26
        %s231 = smul.u32 64, %s230
        %p232 = scmp.lt.s32.totalorder %s16, 1
        %s233 = scalar_select %p232, %s16, 1
        %s234 = smul.addr %s233, 8
        %s235 = scalar_lea.vmem %s3, %s234
        %p236 = scmp.lt.s32.totalorder %s16, 1
        %s237 = scalar_select %p236, %s16, 1
        %s238 = smul.addr %s237, 8
        %s239 = scalar_lea.vmem %s4, %s238
        %v241 = vld [vmem:[%s221] sm:$0xf]
        %v242 = vld [vmem:[%s221 + $0x4] sm:$0xf]
        %v243 = vld [vmem:[%s221 + $0x8] sm:$0xf]
        %v244 = vld [vmem:[%s221 + $0xc] sm:$0xf]
        %v245 = vld [vmem:[%s221 + $0x10] sm:$0xf]
        %v246 = vld [vmem:[%s221 + $0x14] sm:$0xf]
        %v247 = vld [vmem:[%s221 + $0x18] sm:$0xf]
        %v248 = vld [vmem:[%s221 + $0x1c] sm:$0xf]
        %v249 = vld [vmem:[%s221 + $0x20] sm:$0xf]
        %v250 = vld [vmem:[%s221 + $0x24] sm:$0xf]
        %v251 = vld [vmem:[%s221 + $0x28] sm:$0xf]
        %v252 = vld [vmem:[%s221 + $0x2c] sm:$0xf]
        %v253 = vld [vmem:[%s221 + $0x30] sm:$0xf]
        %v254 = vld [vmem:[%s221 + $0x34] sm:$0xf]
        %v255 = vld [vmem:[%s221 + $0x38] sm:$0xf]
        %v256 = vld [vmem:[%s221 + $0x3c] sm:$0xf]
        %v257 = vld [vmem:[%s221 + $0x40] sm:$0xf]
        %v258 = vld [vmem:[%s221 + $0x44] sm:$0xf]
        %v259 = vld [vmem:[%s221 + $0x48] sm:$0xf]
        %v260 = vld [vmem:[%s221 + $0x4c] sm:$0xf]
        %v261 = vld [vmem:[%s221 + $0x50] sm:$0xf]
        %v262 = vld [vmem:[%s221 + $0x54] sm:$0xf]
        %v263 = vld [vmem:[%s221 + $0x58] sm:$0xf]
        %v264 = vld [vmem:[%s221 + $0x5c] sm:$0xf]
        %v265 = vld [vmem:[%s221 + $0x60] sm:$0xf]
        %v266 = vld [vmem:[%s221 + $0x64] sm:$0xf]
        %v267 = vld [vmem:[%s1] sm:$0xf]
        %v268 = vld [vmem:[%s1 + $0x4] sm:$0xf]
        %v269 = vld [vmem:[%s1 + $0x8] sm:$0xf]
        %v270 = vld [vmem:[%s1 + $0xc] sm:$0xf]
        %v271 = vld [vmem:[%s1 + $0x10] sm:$0x3]
        %v298 = vunpack.c.l.b16 %v241
        %v299 = vunpack.c.l.b16 %v242
        %v300 = vunpack.c.l.b16 %v243
        %v301 = vunpack.c.l.b16 %v244
        %v302 = vunpack.c.l.b16 %v245
        %v303 = vunpack.c.l.b16 %v246
        %v304 = vunpack.c.l.b16 %v247
        %v305 = vunpack.c.l.b16 %v248
        %v306 = vunpack.c.l.b16 %v249
        %v307 = vunpack.c.l.b16 %v250
        %v308 = vunpack.c.l.b16 %v251
        %v309 = vunpack.c.l.b16 %v252
        %v310 = vunpack.c.l.b16 %v253
        %v311 = vunpack.c.l.b16 %v254
        %v312 = vunpack.c.l.b16 %v255
        %v313 = vunpack.c.l.b16 %v256
        %v314 = vunpack.c.l.b16 %v257
        %v315 = vunpack.c.l.b16 %v258
        %v316 = vunpack.c.l.b16 %v259
        %v317 = vunpack.c.l.b16 %v260
        %v318 = vunpack.c.l.b16 %v261
        %v319 = vunpack.c.l.b16 %v262
        %v320 = vunpack.c.l.b16 %v263
        %v321 = vunpack.c.l.b16 %v264
        %v322 = vunpack.c.l.b16 %v265
        %v323 = vunpack.c.l.b16 %v266
        %v324 = vpack.c.b16 %v299, %v298
        %v325 = vpack.c.b16 %v301, %v300
        %v326 = vpack.c.b16 %v303, %v302
        %v327 = vpack.c.b16 %v305, %v304
        %v328 = vpack.c.b16 %v307, %v306
        %v329 = vpack.c.b16 %v309, %v308
        %v330 = vpack.c.b16 %v311, %v310
        %v331 = vpack.c.b16 %v313, %v312
        %v332 = vpack.c.b16 %v315, %v314
        %v333 = vpack.c.b16 %v317, %v316
        %v334 = vpack.c.b16 %v319, %v318
        %v335 = vpack.c.b16 %v321, %v320
        %v336 = vpack.c.b16 %v323, %v322
        %v342 = vunpack.c.l.b16 %v267
        %v343 = vunpack.c.l.b16 %v268
        %v344 = vunpack.c.l.b16 %v269
        %v345 = vunpack.c.l.b16 %v270
        %v346 = vunpack.c.l.b16 %v271
        %v347 = vpack.c.b16 %v343, %v342
        %v348 = vpack.c.b16 %v345, %v344
        %v349 = vpack.c.b16 %v346, %v346
        %vm352 = vcmask 293888
        %v354 = vsel %vm352, %v324, 0
        %v357 = vsel %vm352, %v325, 0
        %v360 = vsel %vm352, %v326, 0
        %v363 = vsel %vm352, %v327, 0
        %v366 = vsel %vm352, %v328, 0
        %v369 = vsel %vm352, %v329, 0
        %v372 = vsel %vm352, %v330, 0
        %v375 = vsel %vm352, %v331, 0
        %v378 = vsel %vm352, %v332, 0
        %v381 = vsel %vm352, %v333, 0
        %v384 = vsel %vm352, %v334, 0
        %v387 = vsel %vm352, %v335, 0
        %v390 = vsel %vm352, %v336, 0
        %vm392 = vcmask 1041408
        %v394 = vsel %vm392, %v349, 0
        %396 = vmatprep.subr.bf16.mxu0 0
        %397 = vmatpush1.bf16.msra.mxu0 0
        %398 = vmatprep.subr.bf16.mxu0 0
        %399 = vmatpush1.bf16.msra.mxu0 0
        %400 = vmatprep.subr.bf16.mxu0 0
        %401 = vmatpush1.bf16.msra.mxu0 0
        %402 = vmatprep.subr.bf16.mxu0 0
        %403 = vmatpush1.bf16.msra.mxu0 0
        %404 = vmatprep.subr.bf16.mxu0 0
        %405 = vmatpush1.bf16.msra.mxu0 0
        %406 = vmatprep.subr.bf16.mxu0 0
        %407 = vmatpush1.bf16.msra.mxu0 %v394
        %408 = vmatprep.subr.bf16.mxu0 0
        %409 = vmatpush1.bf16.msra.mxu0 %v348
        %410 = vmatprep.subr.bf16.mxu0 0
        %411 = vmatpush1.bf16.msra.mxu0 %v347
        %412 = vmatprep.subr.bf16.mxu0 0
        %413 = vmatpush2.bf16.msra.mxu0 0
        %414 = vmatprep.subr.bf16.mxu0 0
        %415 = vmatpush2.bf16.msra.mxu0 0
        %416 = vmatprep.subr.bf16.mxu0 0
        %417 = vmatpush2.bf16.msra.mxu0 0
        %418 = vmatprep.subr.bf16.mxu0 0
        %419 = vmatpush2.bf16.msra.mxu0 0
        %420 = vmatprep.subr.bf16.mxu0 0
        %421 = vmatpush2.bf16.msra.mxu0 0
        %422 = vmatprep.subr.bf16.mxu0 0
        %423 = vmatpush2.bf16.msra.mxu0 0
        %424 = vmatprep.subr.bf16.mxu0 0
        %425 = vmatpush2.bf16.msra.mxu0 0
        %426 = vmatprep.subr.bf16.mxu0 0
        %427 = vmatpush2.bf16.msra.mxu0 0
        %428 = vmatprep.mubr.bf16.mxu0 0
        %429 = vmatmul.mubr.bf16.gmra.mxu0 %v354
        %v430 = vpop.f32.mrf.mxu0
        %v431 = vadd.f32 0.0, %v430
        %v432 = vpop.f32.mrf.mxu0
        %v433 = vpop.f32.mrf.mxu0
        %v434 = vadd.f32 0.0, %v433
        %v435 = vpop.f32.mrf.mxu0
        %436 = vmatprep.mubr.bf16.mxu0 0
        %437 = vmatmul.mubr.bf16.gmra.mxu0 %v357
        %v438 = vpop.f32.mrf.mxu0
        %v439 = vadd.f32 0.0, %v438
        %v440 = vpop.f32.mrf.mxu0
        %v441 = vpop.f32.mrf.mxu0
        %v442 = vadd.f32 0.0, %v441
        %v443 = vpop.f32.mrf.mxu0
        %444 = vmatprep.mubr.bf16.mxu0 0
        %445 = vmatmul.mubr.bf16.gmra.mxu0 %v360
        %v446 = vpop.f32.mrf.mxu0
        %v447 = vadd.f32 0.0, %v446
        %v448 = vpop.f32.mrf.mxu0
        %v449 = vpop.f32.mrf.mxu0
        %v450 = vadd.f32 0.0, %v449
        %v451 = vpop.f32.mrf.mxu0
        %452 = vmatprep.mubr.bf16.mxu0 0
        %453 = vmatmul.mubr.bf16.gmra.mxu0 %v363
        %v454 = vpop.f32.mrf.mxu0
        %v455 = vadd.f32 0.0, %v454
        %v456 = vpop.f32.mrf.mxu0
        %v457 = vpop.f32.mrf.mxu0
        %v458 = vadd.f32 0.0, %v457
        %v459 = vpop.f32.mrf.mxu0
        %460 = vmatprep.mubr.bf16.mxu0 0
        %461 = vmatmul.mubr.bf16.gmra.mxu0 %v366
        %v462 = vpop.f32.mrf.mxu0
        %v463 = vadd.f32 0.0, %v462
        %v464 = vpop.f32.mrf.mxu0
        %v465 = vpop.f32.mrf.mxu0
        %v466 = vadd.f32 0.0, %v465
        %v467 = vpop.f32.mrf.mxu0
        %468 = vmatprep.mubr.bf16.mxu0 0
        %469 = vmatmul.mubr.bf16.gmra.mxu0 %v369
        %v470 = vpop.f32.mrf.mxu0
        %v471 = vadd.f32 0.0, %v470
        %v472 = vpop.f32.mrf.mxu0
        %v473 = vpop.f32.mrf.mxu0
        %v474 = vadd.f32 0.0, %v473
        %v475 = vpop.f32.mrf.mxu0
        %476 = vmatprep.mubr.bf16.mxu0 0
        %477 = vmatmul.mubr.bf16.gmra.mxu0 %v372
        %v478 = vpop.f32.mrf.mxu0
        %v479 = vadd.f32 0.0, %v478
        %v480 = vpop.f32.mrf.mxu0
        %v481 = vpop.f32.mrf.mxu0
        %v482 = vadd.f32 0.0, %v481
        %v483 = vpop.f32.mrf.mxu0
        %484 = vmatprep.mubr.bf16.mxu0 0
        %485 = vmatmul.mubr.bf16.gmra.mxu0 %v375
        %v486 = vpop.f32.mrf.mxu0
        %v487 = vadd.f32 0.0, %v486
        %v488 = vpop.f32.mrf.mxu0
        %v489 = vpop.f32.mrf.mxu0
        %v490 = vadd.f32 0.0, %v489
        %v491 = vpop.f32.mrf.mxu0
        %492 = vmatprep.mubr.bf16.mxu0 0
        %493 = vmatmul.mubr.bf16.gmra.mxu0 %v378
        %v494 = vpop.f32.mrf.mxu0
        %v495 = vadd.f32 0.0, %v494
        %v496 = vpop.f32.mrf.mxu0
        %v497 = vpop.f32.mrf.mxu0
        %v498 = vadd.f32 0.0, %v497
        %v499 = vpop.f32.mrf.mxu0
        %500 = vmatprep.mubr.bf16.mxu0 0
        %501 = vmatmul.mubr.bf16.gmra.mxu0 %v381
        %v502 = vpop.f32.mrf.mxu0
        %v503 = vadd.f32 0.0, %v502
        %v504 = vpop.f32.mrf.mxu0
        %v505 = vpop.f32.mrf.mxu0
        %v506 = vadd.f32 0.0, %v505
        %v507 = vpop.f32.mrf.mxu0
        %508 = vmatprep.mubr.bf16.mxu0 0
        %509 = vmatmul.mubr.bf16.gmra.mxu0 %v384
        %v510 = vpop.f32.mrf.mxu0
        %v511 = vadd.f32 0.0, %v510
        %v512 = vpop.f32.mrf.mxu0
        %v513 = vpop.f32.mrf.mxu0
        %v514 = vadd.f32 0.0, %v513
        %v515 = vpop.f32.mrf.mxu0
        %516 = vmatprep.mubr.bf16.mxu0 0
        %517 = vmatmul.mubr.bf16.gmra.mxu0 %v387
        %v518 = vpop.f32.mrf.mxu0
        %v519 = vadd.f32 0.0, %v518
        %v520 = vpop.f32.mrf.mxu0
        %v521 = vpop.f32.mrf.mxu0
        %v522 = vadd.f32 0.0, %v521
        %v523 = vpop.f32.mrf.mxu0
        %524 = vmatprep.mubr.bf16.mxu0 0
        %525 = vmatmul.mubr.bf16.gmra.mxu0 %v390
        %v526 = vpop.f32.mrf.mxu0
        %v527 = vadd.f32 0.0, %v526
        %v528 = vpop.f32.mrf.mxu0
        %v529 = vpop.f32.mrf.mxu0
        %v530 = vadd.f32 0.0, %v529
        %v531 = vpop.f32.mrf.mxu0
        %532 = vdwg.mxu0
        %v533 = vpack.c.bf16 %v434, %v431
        %v534 = vpack.c.bf16 %v442, %v439
        %v535 = vpack.c.bf16 %v450, %v447
        %v536 = vpack.c.bf16 %v458, %v455
        %v537 = vpack.c.bf16 %v466, %v463
        %v538 = vpack.c.bf16 %v474, %v471
        %v539 = vpack.c.bf16 %v482, %v479
        %v540 = vpack.c.bf16 %v490, %v487
        %v541 = vpack.c.bf16 %v498, %v495
        %v542 = vpack.c.bf16 %v506, %v503
        %v543 = vpack.c.bf16 %v514, %v511
        %v544 = vpack.c.bf16 %v522, %v519
        %v545 = vpack.c.bf16 %v530, %v527
        %v559 = vunpack.c.l.b16 %v533
        %v560 = vunpack.c.h.b16 %v533
        %v561 = vunpack.c.l.b16 %v534
        %v562 = vunpack.c.h.b16 %v534
        %v563 = vunpack.c.l.b16 %v535
        %v564 = vunpack.c.h.b16 %v535
        %v565 = vunpack.c.l.b16 %v536
        %v566 = vunpack.c.h.b16 %v536
        %v567 = vunpack.c.l.b16 %v537
        %v568 = vunpack.c.h.b16 %v537
        %v569 = vunpack.c.l.b16 %v538
        %v570 = vunpack.c.h.b16 %v538
        %v571 = vunpack.c.l.b16 %v539
        %v572 = vunpack.c.h.b16 %v539
        %v573 = vunpack.c.l.b16 %v540
        %v574 = vunpack.c.h.b16 %v540
        %v575 = vunpack.c.l.b16 %v541
        %v576 = vunpack.c.h.b16 %v541
        %v577 = vunpack.c.l.b16 %v542
        %v578 = vunpack.c.h.b16 %v542
        %v579 = vunpack.c.l.b16 %v543
        %v580 = vunpack.c.h.b16 %v543
        %v581 = vunpack.c.l.b16 %v544
        %v582 = vunpack.c.h.b16 %v544
        %v583 = vunpack.c.l.b16 %v545
        %v584 = vunpack.c.h.b16 %v545
        %v585 = vpack.c.b16 %v559, %v559
        %v586 = vpack.c.b16 %v560, %v560
        %v587 = vpack.c.b16 %v561, %v561
        %v588 = vpack.c.b16 %v562, %v562
        %v589 = vpack.c.b16 %v563, %v563
        %v590 = vpack.c.b16 %v564, %v564
        %v591 = vpack.c.b16 %v565, %v565
        %v592 = vpack.c.b16 %v566, %v566
        %v593 = vpack.c.b16 %v567, %v567
        %v594 = vpack.c.b16 %v568, %v568
        %v595 = vpack.c.b16 %v569, %v569
        %v596 = vpack.c.b16 %v570, %v570
        %v597 = vpack.c.b16 %v571, %v571
        %v598 = vpack.c.b16 %v572, %v572
        %v599 = vpack.c.b16 %v573, %v573
        %v600 = vpack.c.b16 %v574, %v574
        %v601 = vpack.c.b16 %v575, %v575
        %v602 = vpack.c.b16 %v576, %v576
        %v603 = vpack.c.b16 %v577, %v577
        %v604 = vpack.c.b16 %v578, %v578
        %v605 = vpack.c.b16 %v579, %v579
        %v606 = vpack.c.b16 %v580, %v580
        %v607 = vpack.c.b16 %v581, %v581
        %v608 = vpack.c.b16 %v582, %v582
        %v609 = vpack.c.b16 %v583, %v583
        %v610 = vpack.c.b16 %v584, %v584
        %637 = vst [vmem:[%s200] sm:$0xf] %v585
        %638 = vst [vmem:[%s200 + $0x4] sm:$0xf] %v586
        %639 = vst [vmem:[%s200 + $0x8] sm:$0xf] %v587
        %640 = vst [vmem:[%s200 + $0xc] sm:$0xf] %v588
        %641 = vst [vmem:[%s200 + $0x10] sm:$0xf] %v589
        %642 = vst [vmem:[%s200 + $0x14] sm:$0xf] %v590
        %643 = vst [vmem:[%s200 + $0x18] sm:$0xf] %v591
        %644 = vst [vmem:[%s200 + $0x1c] sm:$0xf] %v592
        %645 = vst [vmem:[%s200 + $0x20] sm:$0xf] %v593
        %646 = vst [vmem:[%s200 + $0x24] sm:$0xf] %v594
        %647 = vst [vmem:[%s200 + $0x28] sm:$0xf] %v595
        %648 = vst [vmem:[%s200 + $0x2c] sm:$0xf] %v596
        %649 = vst [vmem:[%s200 + $0x30] sm:$0xf] %v597
        %650 = vst [vmem:[%s200 + $0x34] sm:$0xf] %v598
        %651 = vst [vmem:[%s200 + $0x38] sm:$0xf] %v599
        %652 = vst [vmem:[%s200 + $0x3c] sm:$0xf] %v600
        %653 = vst [vmem:[%s200 + $0x40] sm:$0xf] %v601
        %654 = vst [vmem:[%s200 + $0x44] sm:$0xf] %v602
        %655 = vst [vmem:[%s200 + $0x48] sm:$0xf] %v603
        %656 = vst [vmem:[%s200 + $0x4c] sm:$0xf] %v604
        %657 = vst [vmem:[%s200 + $0x50] sm:$0xf] %v605
        %658 = vst [vmem:[%s200 + $0x54] sm:$0xf] %v606
        %659 = vst [vmem:[%s200 + $0x58] sm:$0xf] %v607
        %660 = vst [vmem:[%s200 + $0x5c] sm:$0xf] %v608
        %661 = vst [vmem:[%s200 + $0x60] sm:$0xf] %v609
        %662 = vst [vmem:[%s200 + $0x64] sm:$0xf] %v610
        %s663 = smul.u32 %s16, 208
        %s664 = ssub.s32 392, %s663
        %v665 = vlaneseq
        %v666 = vshrl.u32 %v665, 7
        %v667 = vadd.s32 %v666, 8
        %v668 = vadd.s32 %v666, 16
        %v669 = vadd.s32 %v666, 24
        %v670 = vadd.s32 %v666, 32
        %v671 = vadd.s32 %v666, 40
        %v672 = vadd.s32 %v666, 48
        %v673 = vadd.s32 %v666, 56
        %v674 = vadd.s32 %v666, 64
        %v675 = vadd.s32 %v666, 72
        %v676 = vadd.s32 %v666, 80
        %v677 = vadd.s32 %v666, 88
        %v678 = vadd.s32 %v666, 96
        %v679 = vadd.s32 %v666, 104
        %v680 = vadd.s32 %v666, 112
        %v681 = vadd.s32 %v666, 120
        %v682 = vadd.s32 %v666, 128
        %v683 = vadd.s32 %v666, 136
        %v684 = vadd.s32 %v666, 144
        %v685 = vadd.s32 %v666, 152
        %v686 = vadd.s32 %v666, 160
        %v687 = vadd.s32 %v666, 168
        %v688 = vadd.s32 %v666, 176
        %v689 = vadd.s32 %v666, 184
        %v690 = vadd.s32 %v666, 192
        %v691 = vadd.s32 %v666, 200
        %v692 = vstv %s664
        %vm693 = vcmp.lt.s32.totalorder %v666, %v692
        %vm694 = vcmp.lt.s32.totalorder %v667, %v692
        %vm695 = vcmp.lt.s32.totalorder %v668, %v692
        %vm696 = vcmp.lt.s32.totalorder %v669, %v692
        %vm697 = vcmp.lt.s32.totalorder %v670, %v692
        %vm698 = vcmp.lt.s32.totalorder %v671, %v692
        %vm699 = vcmp.lt.s32.totalorder %v672, %v692
        %vm700 = vcmp.lt.s32.totalorder %v673, %v692
        %vm701 = vcmp.lt.s32.totalorder %v674, %v692
        %vm702 = vcmp.lt.s32.totalorder %v675, %v692
        %vm703 = vcmp.lt.s32.totalorder %v676, %v692
        %vm704 = vcmp.lt.s32.totalorder %v677, %v692
        %vm705 = vcmp.lt.s32.totalorder %v678, %v692
        %vm706 = vcmp.lt.s32.totalorder %v679, %v692
        %vm707 = vcmp.lt.s32.totalorder %v680, %v692
        %vm708 = vcmp.lt.s32.totalorder %v681, %v692
        %vm709 = vcmp.lt.s32.totalorder %v682, %v692
        %vm710 = vcmp.lt.s32.totalorder %v683, %v692
        %vm711 = vcmp.lt.s32.totalorder %v684, %v692
        %vm712 = vcmp.lt.s32.totalorder %v685, %v692
        %vm713 = vcmp.lt.s32.totalorder %v686, %v692
        %vm714 = vcmp.lt.s32.totalorder %v687, %v692
        %vm715 = vcmp.lt.s32.totalorder %v688, %v692
        %vm716 = vcmp.lt.s32.totalorder %v689, %v692
        %vm717 = vcmp.lt.s32.totalorder %v690, %v692
        %vm718 = vcmp.lt.s32.totalorder %v691, %v692
        %p719 = scmp.lt.s32.totalorder %s664, 208
        %s720 = scalar_select %p719, %s664, 208
        %s721 = scvt.s32.f32 %s720
        %v722 = vsel %vm693, %v431, 0.0
        %v723 = vsel %vm694, %v434, 0.0
        %v724 = vsel %vm695, %v439, 0.0
        %v725 = vsel %vm696, %v442, 0.0
        %v726 = vsel %vm697, %v447, 0.0
        %v727 = vsel %vm698, %v450, 0.0
        %v728 = vsel %vm699, %v455, 0.0
        %v729 = vsel %vm700, %v458, 0.0
        %v730 = vsel %vm701, %v463, 0.0
        %v731 = vsel %vm702, %v466, 0.0
        %v732 = vsel %vm703, %v471, 0.0
        %v733 = vsel %vm704, %v474, 0.0
        %v734 = vsel %vm705, %v479, 0.0
        %v735 = vsel %vm706, %v482, 0.0
        %v736 = vsel %vm707, %v487, 0.0
        %v737 = vsel %vm708, %v490, 0.0
        %v738 = vsel %vm709, %v495, 0.0
        %v739 = vsel %vm710, %v498, 0.0
        %v740 = vsel %vm711, %v503, 0.0
        %v741 = vsel %vm712, %v506, 0.0
        %v742 = vsel %vm713, %v511, 0.0
        %v743 = vsel %vm714, %v514, 0.0
        %v744 = vsel %vm715, %v519, 0.0
        %v745 = vsel %vm716, %v522, 0.0
        %v746 = vsel %vm717, %v527, 0.0
        %v747 = vsel %vm718, %v530, 0.0
        %v748 = vadd.f32 %v722, %v723
        %v749 = vadd.f32 %v748, %v724
        %v750 = vadd.f32 %v749, %v725
        %v751 = vadd.f32 %v750, %v726
        %v752 = vadd.f32 %v751, %v727
        %v753 = vadd.f32 %v752, %v728
        %v754 = vadd.f32 %v753, %v729
        %v755 = vadd.f32 %v754, %v730
        %v756 = vadd.f32 %v755, %v731
        %v757 = vadd.f32 %v756, %v732
        %v758 = vadd.f32 %v757, %v733
        %v759 = vadd.f32 %v758, %v734
        %v760 = vadd.f32 %v759, %v735
        %v761 = vadd.f32 %v760, %v736
        %v762 = vadd.f32 %v761, %v737
        %v763 = vadd.f32 %v762, %v738
        %v764 = vadd.f32 %v763, %v739
        %v765 = vadd.f32 %v764, %v740
        %v766 = vadd.f32 %v765, %v741
        %v767 = vadd.f32 %v766, %v742
        %v768 = vadd.f32 %v767, %v743
        %v769 = vadd.f32 %v768, %v744
        %v770 = vadd.f32 %v769, %v745
        %v771 = vadd.f32 %v770, %v746
        %v772 = vadd.f32 %v771, %v747
        %v773 = vrot.slane %v772, 4
        %v774 = vadd.f32 %v772, %v773
        %v775 = vrot.slane %v774, 2
        %v776 = vadd.f32 %v774, %v775
        %v777 = vrot.slane %v776, 1
        %v778 = vadd.f32 %v776, %v777
        %v779 = vstv %s721
        %v780 = vrcp.pop %v779
        %v781 = vmul.f32 %v778, %v780
        %v782 = vsub.f32 %v431, %v781
        %v783 = vsub.f32 %v434, %v781
        %v784 = vsub.f32 %v439, %v781
        %v785 = vsub.f32 %v442, %v781
        %v786 = vsub.f32 %v447, %v781
        %v787 = vsub.f32 %v450, %v781
        %v788 = vsub.f32 %v455, %v781
        %v789 = vsub.f32 %v458, %v781
        %v790 = vsub.f32 %v463, %v781
        %v791 = vsub.f32 %v466, %v781
        %v792 = vsub.f32 %v471, %v781
        %v793 = vsub.f32 %v474, %v781
        %v794 = vsub.f32 %v479, %v781
        %v795 = vsub.f32 %v482, %v781
        %v796 = vsub.f32 %v487, %v781
        %v797 = vsub.f32 %v490, %v781
        %v798 = vsub.f32 %v495, %v781
        %v799 = vsub.f32 %v498, %v781
        %v800 = vsub.f32 %v503, %v781
        %v801 = vsub.f32 %v506, %v781
        %v802 = vsub.f32 %v511, %v781
        %v803 = vsub.f32 %v514, %v781
        %v804 = vsub.f32 %v519, %v781
        %v805 = vsub.f32 %v522, %v781
        %v806 = vsub.f32 %v527, %v781
        %v807 = vsub.f32 %v530, %v781
        %v808 = vsel %vm693, %v782, 0.0
        %v809 = vsel %vm694, %v783, 0.0
        %v810 = vsel %vm695, %v784, 0.0
        %v811 = vsel %vm696, %v785, 0.0
        %v812 = vsel %vm697, %v786, 0.0
        %v813 = vsel %vm698, %v787, 0.0
        %v814 = vsel %vm699, %v788, 0.0
        %v815 = vsel %vm700, %v789, 0.0
        %v816 = vsel %vm701, %v790, 0.0
        %v817 = vsel %vm702, %v791, 0.0
        %v818 = vsel %vm703, %v792, 0.0
        %v819 = vsel %vm704, %v793, 0.0
        %v820 = vsel %vm705, %v794, 0.0
        %v821 = vsel %vm706, %v795, 0.0
        %v822 = vsel %vm707, %v796, 0.0
        %v823 = vsel %vm708, %v797, 0.0
        %v824 = vsel %vm709, %v798, 0.0
        %v825 = vsel %vm710, %v799, 0.0
        %v826 = vsel %vm711, %v800, 0.0
        %v827 = vsel %vm712, %v801, 0.0
        %v828 = vsel %vm713, %v802, 0.0
        %v829 = vsel %vm714, %v803, 0.0
        %v830 = vsel %vm715, %v804, 0.0
        %v831 = vsel %vm716, %v805, 0.0
        %v832 = vsel %vm717, %v806, 0.0
        %v833 = vsel %vm718, %v807, 0.0
        %v834 = vmul.f32 %v808, %v808
        %v835 = vmul.f32 %v809, %v809
        %v836 = vmul.f32 %v810, %v810
        %v837 = vmul.f32 %v811, %v811
        %v838 = vmul.f32 %v812, %v812
        %v839 = vmul.f32 %v813, %v813
        %v840 = vmul.f32 %v814, %v814
        %v841 = vmul.f32 %v815, %v815
        %v842 = vmul.f32 %v816, %v816
        %v843 = vmul.f32 %v817, %v817
        %v844 = vmul.f32 %v818, %v818
        %v845 = vmul.f32 %v819, %v819
        %v846 = vmul.f32 %v820, %v820
        %v847 = vmul.f32 %v821, %v821
        %v848 = vmul.f32 %v822, %v822
        %v849 = vmul.f32 %v823, %v823
        %v850 = vmul.f32 %v824, %v824
        %v851 = vmul.f32 %v825, %v825
        %v852 = vmul.f32 %v826, %v826
        %v853 = vmul.f32 %v827, %v827
        %v854 = vmul.f32 %v828, %v828
        %v855 = vmul.f32 %v829, %v829
        %v856 = vmul.f32 %v830, %v830
        %v857 = vmul.f32 %v831, %v831
        %v858 = vmul.f32 %v832, %v832
        %v859 = vmul.f32 %v833, %v833
        %v860 = vadd.f32 %v834, %v835
        %v861 = vadd.f32 %v860, %v836
        %v862 = vadd.f32 %v861, %v837
        %v863 = vadd.f32 %v862, %v838
        %v864 = vadd.f32 %v863, %v839
        %v865 = vadd.f32 %v864, %v840
        %v866 = vadd.f32 %v865, %v841
        %v867 = vadd.f32 %v866, %v842
        %v868 = vadd.f32 %v867, %v843
        %v869 = vadd.f32 %v868, %v844
        %v870 = vadd.f32 %v869, %v845
        %v871 = vadd.f32 %v870, %v846
        %v872 = vadd.f32 %v871, %v847
        %v873 = vadd.f32 %v872, %v848
        %v874 = vadd.f32 %v873, %v849
        %v875 = vadd.f32 %v874, %v850
        %v876 = vadd.f32 %v875, %v851
        %v877 = vadd.f32 %v876, %v852
        %v878 = vadd.f32 %v877, %v853
        %v879 = vadd.f32 %v878, %v854
        %v880 = vadd.f32 %v879, %v855
        %v881 = vadd.f32 %v880, %v856
        %v882 = vadd.f32 %v881, %v857
        %v883 = vadd.f32 %v882, %v858
        %v884 = vadd.f32 %v883, %v859
        %v885 = vrot.slane %v884, 4
        %v886 = vadd.f32 %v884, %v885
        %v887 = vrot.slane %v886, 2
        %v888 = vadd.f32 %v886, %v887
        %v889 = vrot.slane %v888, 1
        %v890 = vadd.f32 %v888, %v889
        %891 = vst [vmem:[%s235] sm:$0xff] %v778
        %892 = vst [vmem:[%s239] sm:$0xff] %v890
        %s893 = sand.u32 %s71, 1
        %s894 = sand.u32 %s71, 1
        %s895 = smul.addr %s894, 104
        %s896 = scalar_lea.vmem [#allocation2], %s895
        %p897 = scmp.lt.s32.totalorder %s16, 1
        %s898 = scalar_select %p897, %s16, 1
        %s899 = smul.addr %s898, 8
        %s900 = scalar_lea.vmem %s3, %s899
        %p901 = scmp.lt.s32.totalorder %s16, 1
        %s902 = scalar_select %p901, %s16, 1
        %s903 = smul.addr %s902, 8
        %s904 = scalar_lea.vmem %s4, %s903
        // Predicated region
        $region29: #{conv_bn_relu.2} parent=27 // pred_check
          %p905 = pneg %p81
        $region30: #{conv_bn_relu.2} parent=27 // pred_check_branch
          %907 = sbr.rel (%p905) target = $region32
        $region31: #{conv_bn_relu.2} parent=27 // pred_region
          %s908 = smul.u32 26, %s16
          %s909 = ssub.s32 49, %s908
          %p910 = scmp.lt.s32.totalorder %s909, 26
          %s911 = scalar_select %p910, %s909, 26
          %s912 = smul.u32 64, %s911
          %p913 = scmp.ne.s32.totalorder 0, %s912
          %s914 = smul.addr %s908, 4
          %s915 = scalar_lea.vmem %s2, %s914
          // Predicated region
          $region33: #{conv_bn_relu.2} parent=31 // pred_check
            %p916 = pneg %p913
          $region34: #{conv_bn_relu.2} parent=31 // pred_check_branch
            %918 = sbr.rel (%p916) target = $region36
          $region35: #{conv_bn_relu.2} parent=31 // pred_region
            // Predicated region
            $region37: #{conv_bn_relu.2} parent=35 // pred_check
              _
            $region38: #{conv_bn_relu.2} parent=35 // pred_check_branch
              %920 = sbr.rel target = $region40
            $region39: #{conv_bn_relu.2} parent=35 // pred_region
              // Predicated region
              $region59: #{conv_bn_relu.2} parent=39 // pred_check
                _
              $region60: #{conv_bn_relu.2} parent=39 // pred_check_branch
                %1021 = sbr.rel (0) target = $region62
              $region61: #{conv_bn_relu.2} parent=39 // pred_region
                %s1023 = ssub.s32 16, 1
                %s1024 = sdiv.u32.pop %s911, 26
                %s1025 = srem.u32.pop %s911, 26
                // While loop
                $region63: #{conv_bn_relu.2} parent=61 // loop_pre_header
                  _
                $region64: #{conv_bn_relu.2} parent=61 // loop_header
                  %s1027 = sphi 0, %s1029
                  %p1028 = scmp.ge.s32.totalorder %s1027, %s1024
                  %s1032 = sphi 0, %s1089
                  %s1033 = sphi %s896, %s1092
                  %s1034 = sphi %s915, %s1093
                $region65: #{conv_bn_relu.2} parent=61 // loop_header_branch
                  %1031 = sbr.rel (%p1028) target = $region69
                $region66: #{conv_bn_relu.2} parent=61 // loop_body
                  %v1035 = vld [vmem:[%s1033] sm:%s1023]
                  %1036 = vst [vmem:[%s1034] sm:%s1023] %v1035
                  %v1037 = vld [vmem:[%s1033 + $0x4] sm:%s1023]
                  %1038 = vst [vmem:[%s1034 + $0x4] sm:%s1023] %v1037
                  %v1039 = vld [vmem:[%s1033 + $0x8] sm:%s1023]
                  %1040 = vst [vmem:[%s1034 + $0x8] sm:%s1023] %v1039
                  %v1041 = vld [vmem:[%s1033 + $0xc] sm:%s1023]
                  %1042 = vst [vmem:[%s1034 + $0xc] sm:%s1023] %v1041
                  %v1043 = vld [vmem:[%s1033 + $0x10] sm:%s1023]
                  %1044 = vst [vmem:[%s1034 + $0x10] sm:%s1023] %v1043
                  %v1045 = vld [vmem:[%s1033 + $0x14] sm:%s1023]
                  %1046 = vst [vmem:[%s1034 + $0x14] sm:%s1023] %v1045
                  %v1047 = vld [vmem:[%s1033 + $0x18] sm:%s1023]
                  %1048 = vst [vmem:[%s1034 + $0x18] sm:%s1023] %v1047
                  %v1049 = vld [vmem:[%s1033 + $0x1c] sm:%s1023]
                  %1050 = vst [vmem:[%s1034 + $0x1c] sm:%s1023] %v1049
                  %v1051 = vld [vmem:[%s1033 + $0x20] sm:%s1023]
                  %1052 = vst [vmem:[%s1034 + $0x20] sm:%s1023] %v1051
                  %v1053 = vld [vmem:[%s1033 + $0x24] sm:%s1023]
                  %1054 = vst [vmem:[%s1034 + $0x24] sm:%s1023] %v1053
                  %v1055 = vld [vmem:[%s1033 + $0x28] sm:%s1023]
                  %1056 = vst [vmem:[%s1034 + $0x28] sm:%s1023] %v1055
                  %v1057 = vld [vmem:[%s1033 + $0x2c] sm:%s1023]
                  %1058 = vst [vmem:[%s1034 + $0x2c] sm:%s1023] %v1057
                  %v1059 = vld [vmem:[%s1033 + $0x30] sm:%s1023]
                  %1060 = vst [vmem:[%s1034 + $0x30] sm:%s1023] %v1059
                  %v1061 = vld [vmem:[%s1033 + $0x34] sm:%s1023]
                  %1062 = vst [vmem:[%s1034 + $0x34] sm:%s1023] %v1061
                  %v1063 = vld [vmem:[%s1033 + $0x38] sm:%s1023]
                  %1064 = vst [vmem:[%s1034 + $0x38] sm:%s1023] %v1063
                  %v1065 = vld [vmem:[%s1033 + $0x3c] sm:%s1023]
                  %1066 = vst [vmem:[%s1034 + $0x3c] sm:%s1023] %v1065
                  %v1067 = vld [vmem:[%s1033 + $0x40] sm:%s1023]
                  %1068 = vst [vmem:[%s1034 + $0x40] sm:%s1023] %v1067
                  %v1069 = vld [vmem:[%s1033 + $0x44] sm:%s1023]
                  %1070 = vst [vmem:[%s1034 + $0x44] sm:%s1023] %v1069
                  %v1071 = vld [vmem:[%s1033 + $0x48] sm:%s1023]
                  %1072 = vst [vmem:[%s1034 + $0x48] sm:%s1023] %v1071
                  %v1073 = vld [vmem:[%s1033 + $0x4c] sm:%s1023]
                  %1074 = vst [vmem:[%s1034 + $0x4c] sm:%s1023] %v1073
                  %v1075 = vld [vmem:[%s1033 + $0x50] sm:%s1023]
                  %1076 = vst [vmem:[%s1034 + $0x50] sm:%s1023] %v1075
                  %v1077 = vld [vmem:[%s1033 + $0x54] sm:%s1023]
                  %1078 = vst [vmem:[%s1034 + $0x54] sm:%s1023] %v1077
                  %v1079 = vld [vmem:[%s1033 + $0x58] sm:%s1023]
                  %1080 = vst [vmem:[%s1034 + $0x58] sm:%s1023] %v1079
                  %v1081 = vld [vmem:[%s1033 + $0x5c] sm:%s1023]
                  %1082 = vst [vmem:[%s1034 + $0x5c] sm:%s1023] %v1081
                  %v1083 = vld [vmem:[%s1033 + $0x60] sm:%s1023]
                  %1084 = vst [vmem:[%s1034 + $0x60] sm:%s1023] %v1083
                  %v1085 = vld [vmem:[%s1033 + $0x64] sm:%s1023]
                  %1086 = vst [vmem:[%s1034 + $0x64] sm:%s1023] %v1085
                  %s1087 = sadd.s32 1, %s1032
                  %p1088 = scmp.ge.s32.totalorder %s1087, %s1024
                  %s1089 = scalar_select %p1088, 0, %s1087
                  %s1090 = smul.u32 %s1089, 104
                  %s1091 = smul.u32 %s1089, 104
                  %s1092 = scalar_lea.vmem %s896, %s1090 [#allocation2]
                  %s1093 = scalar_lea.vmem %s915, %s1091
                $region67: #{conv_bn_relu.2} parent=61 // loop_footer
                  %s1029 = sadd.s32 %s1027, 1
                $region68: #{conv_bn_relu.2} parent=61 // loop_footer_branch
                  %1026 = sbr.rel target = $region64
                $region69: #{conv_bn_relu.2} parent=61 // loop_exit
                  _
                %s1094 = sdiv.u32.pop %s911, 26
                %s1095 = srem.u32.pop %s911, 26
                %s1096 = smul.u32 %s1094, 26
                %s1097 = smul.u32 4, %s1096
                %s1098 = scalar_lea.vmem %s896, %s1097 [#allocation2]
                %s1099 = smul.u32 4, %s1096
                %s1100 = scalar_lea.vmem %s915, %s1099
                // While loop
                $region70: #{conv_bn_relu.2} parent=61 // loop_pre_header
                  _
                $region71: #{conv_bn_relu.2} parent=61 // loop_header
                  %s1102 = sphi 0, %s1104
                  %p1103 = scmp.ge.s32.totalorder %s1102, %s1095
                  %s1107 = sphi 0, %s1114
                  %s1108 = sphi %s1098, %s1117
                  %s1109 = sphi %s1100, %s1118
                $region72: #{conv_bn_relu.2} parent=61 // loop_header_branch
                  %1106 = sbr.rel (%p1103) target = $region76
                $region73: #{conv_bn_relu.2} parent=61 // loop_body
                  %v1110 = vld [vmem:[%s1108] sm:%s1023]
                  %1111 = vst [vmem:[%s1109] sm:%s1023] %v1110
                  %s1112 = sadd.s32 1, %s1107
                  %p1113 = scmp.ge.s32.totalorder %s1112, %s1095
                  %s1114 = scalar_select %p1113, 0, %s1112
                  %s1115 = smul.u32 %s1114, 4
                  %s1116 = smul.u32 %s1114, 4
                  %s1117 = scalar_lea.vmem %s1098, %s1115 [#allocation2]
                  %s1118 = scalar_lea.vmem %s1100, %s1116
                $region74: #{conv_bn_relu.2} parent=61 // loop_footer
                  %s1104 = sadd.s32 %s1102, 1
                $region75: #{conv_bn_relu.2} parent=61 // loop_footer_branch
                  %1101 = sbr.rel target = $region71
                $region76: #{conv_bn_relu.2} parent=61 // loop_exit
                  _
              $region62: #{conv_bn_relu.2} parent=39 // pred_fallthru
                _
            $region40: #{conv_bn_relu.2} parent=35 // pred_fallthru
              _
            // Predicated region
            $region41: #{conv_bn_relu.2} parent=35 // pred_check
              _
            $region42: #{conv_bn_relu.2} parent=35 // pred_check_branch
              %922 = sbr.rel (0) target = $region44
            $region43: #{conv_bn_relu.2} parent=35 // pred_region
              %s924 = ssub.s32 16, 1
              %s925 = sdiv.u32.pop %s911, 26
              %s926 = srem.u32.pop %s911, 26
              // While loop
              $region45: #{conv_bn_relu.2} parent=43 // loop_pre_header
                _
              $region46: #{conv_bn_relu.2} parent=43 // loop_header
                %s928 = sphi 0, %s930
                %p929 = scmp.ge.s32.totalorder %s928, %s925
                %s933 = sphi 0, %s990
                %s934 = sphi %s896, %s993
                %s935 = sphi %s915, %s994
              $region47: #{conv_bn_relu.2} parent=43 // loop_header_branch
                %932 = sbr.rel (%p929) target = $region51
              $region48: #{conv_bn_relu.2} parent=43 // loop_body
                %v936 = vld [vmem:[%s934] sm:%s924]
                %937 = vst [vmem:[%s935] sm:%s924] %v936
                %v938 = vld [vmem:[%s934 + $0x4] sm:%s924]
                %939 = vst [vmem:[%s935 + $0x4] sm:%s924] %v938
                %v940 = vld [vmem:[%s934 + $0x8] sm:%s924]
                %941 = vst [vmem:[%s935 + $0x8] sm:%s924] %v940
                %v942 = vld [vmem:[%s934 + $0xc] sm:%s924]
                %943 = vst [vmem:[%s935 + $0xc] sm:%s924] %v942
                %v944 = vld [vmem:[%s934 + $0x10] sm:%s924]
                %945 = vst [vmem:[%s935 + $0x10] sm:%s924] %v944
                %v946 = vld [vmem:[%s934 + $0x14] sm:%s924]
                %947 = vst [vmem:[%s935 + $0x14] sm:%s924] %v946
                %v948 = vld [vmem:[%s934 + $0x18] sm:%s924]
                %949 = vst [vmem:[%s935 + $0x18] sm:%s924] %v948
                %v950 = vld [vmem:[%s934 + $0x1c] sm:%s924]
                %951 = vst [vmem:[%s935 + $0x1c] sm:%s924] %v950
                %v952 = vld [vmem:[%s934 + $0x20] sm:%s924]
                %953 = vst [vmem:[%s935 + $0x20] sm:%s924] %v952
                %v954 = vld [vmem:[%s934 + $0x24] sm:%s924]
                %955 = vst [vmem:[%s935 + $0x24] sm:%s924] %v954
                %v956 = vld [vmem:[%s934 + $0x28] sm:%s924]
                %957 = vst [vmem:[%s935 + $0x28] sm:%s924] %v956
                %v958 = vld [vmem:[%s934 + $0x2c] sm:%s924]
                %959 = vst [vmem:[%s935 + $0x2c] sm:%s924] %v958
                %v960 = vld [vmem:[%s934 + $0x30] sm:%s924]
                %961 = vst [vmem:[%s935 + $0x30] sm:%s924] %v960
                %v962 = vld [vmem:[%s934 + $0x34] sm:%s924]
                %963 = vst [vmem:[%s935 + $0x34] sm:%s924] %v962
                %v964 = vld [vmem:[%s934 + $0x38] sm:%s924]
                %965 = vst [vmem:[%s935 + $0x38] sm:%s924] %v964
                %v966 = vld [vmem:[%s934 + $0x3c] sm:%s924]
                %967 = vst [vmem:[%s935 + $0x3c] sm:%s924] %v966
                %v968 = vld [vmem:[%s934 + $0x40] sm:%s924]
                %969 = vst [vmem:[%s935 + $0x40] sm:%s924] %v968
                %v970 = vld [vmem:[%s934 + $0x44] sm:%s924]
                %971 = vst [vmem:[%s935 + $0x44] sm:%s924] %v970
                %v972 = vld [vmem:[%s934 + $0x48] sm:%s924]
                %973 = vst [vmem:[%s935 + $0x48] sm:%s924] %v972
                %v974 = vld [vmem:[%s934 + $0x4c] sm:%s924]
                %975 = vst [vmem:[%s935 + $0x4c] sm:%s924] %v974
                %v976 = vld [vmem:[%s934 + $0x50] sm:%s924]
                %977 = vst [vmem:[%s935 + $0x50] sm:%s924] %v976
                %v978 = vld [vmem:[%s934 + $0x54] sm:%s924]
                %979 = vst [vmem:[%s935 + $0x54] sm:%s924] %v978
                %v980 = vld [vmem:[%s934 + $0x58] sm:%s924]
                %981 = vst [vmem:[%s935 + $0x58] sm:%s924] %v980
                %v982 = vld [vmem:[%s934 + $0x5c] sm:%s924]
                %983 = vst [vmem:[%s935 + $0x5c] sm:%s924] %v982
                %v984 = vld [vmem:[%s934 + $0x60] sm:%s924]
                %985 = vst [vmem:[%s935 + $0x60] sm:%s924] %v984
                %v986 = vld [vmem:[%s934 + $0x64] sm:%s924]
                %987 = vst [vmem:[%s935 + $0x64] sm:%s924] %v986
                %s988 = sadd.s32 1, %s933
                %p989 = scmp.ge.s32.totalorder %s988, %s925
                %s990 = scalar_select %p989, 0, %s988
                %s991 = smul.u32 %s990, 104
                %s992 = smul.u32 %s990, 104
                %s993 = scalar_lea.vmem %s896, %s991 [#allocation2]
                %s994 = scalar_lea.vmem %s915, %s992
              $region49: #{conv_bn_relu.2} parent=43 // loop_footer
                %s930 = sadd.s32 %s928, 1
              $region50: #{conv_bn_relu.2} parent=43 // loop_footer_branch
                %927 = sbr.rel target = $region46
              $region51: #{conv_bn_relu.2} parent=43 // loop_exit
                _
              %s995 = sdiv.u32.pop %s911, 26
              %s996 = srem.u32.pop %s911, 26
              %s997 = smul.u32 %s995, 26
              %s998 = smul.u32 4, %s997
              %s999 = scalar_lea.vmem %s896, %s998 [#allocation2]
              %s1000 = smul.u32 4, %s997
              %s1001 = scalar_lea.vmem %s915, %s1000
              // While loop
              $region52: #{conv_bn_relu.2} parent=43 // loop_pre_header
                _
              $region53: #{conv_bn_relu.2} parent=43 // loop_header
                %s1003 = sphi 0, %s1005
                %p1004 = scmp.ge.s32.totalorder %s1003, %s996
                %s1008 = sphi 0, %s1015
                %s1009 = sphi %s999, %s1018
                %s1010 = sphi %s1001, %s1019
              $region54: #{conv_bn_relu.2} parent=43 // loop_header_branch
                %1007 = sbr.rel (%p1004) target = $region58
              $region55: #{conv_bn_relu.2} parent=43 // loop_body
                %v1011 = vld [vmem:[%s1009] sm:%s924]
                %1012 = vst [vmem:[%s1010] sm:%s924] %v1011
                %s1013 = sadd.s32 1, %s1008
                %p1014 = scmp.ge.s32.totalorder %s1013, %s996
                %s1015 = scalar_select %p1014, 0, %s1013
                %s1016 = smul.u32 %s1015, 4
                %s1017 = smul.u32 %s1015, 4
                %s1018 = scalar_lea.vmem %s999, %s1016 [#allocation2]
                %s1019 = scalar_lea.vmem %s1001, %s1017
              $region56: #{conv_bn_relu.2} parent=43 // loop_footer
                %s1005 = sadd.s32 %s1003, 1
              $region57: #{conv_bn_relu.2} parent=43 // loop_footer_branch
                %1002 = sbr.rel target = $region53
              $region58: #{conv_bn_relu.2} parent=43 // loop_exit
                _
            $region44: #{conv_bn_relu.2} parent=35 // pred_fallthru
              _
          $region36: #{conv_bn_relu.2} parent=31 // pred_fallthru
            _
          %1119 = vnop
        $region32: #{conv_bn_relu.2} parent=27 // pred_fallthru
          _
        // Predicated region
        $region77: #{conv_bn_relu.2} parent=27 // pred_check
          %p1120 = pneg %p107
        $region78: #{conv_bn_relu.2} parent=27 // pred_check_branch
          %1122 = sbr.rel (%p1120) target = $region80
        $region79: #{conv_bn_relu.2} parent=27 // pred_region
          _
        $region80: #{conv_bn_relu.2} parent=27 // pred_fallthru
          _
        // Predicated region
        $region81: #{conv_bn_relu.2} parent=27 // pred_check
          %p1123 = pneg %p133
        $region82: #{conv_bn_relu.2} parent=27 // pred_check_branch
          %1125 = sbr.rel (%p1123) target = $region84
        $region83: #{conv_bn_relu.2} parent=27 // pred_region
          _
        $region84: #{conv_bn_relu.2} parent=27 // pred_fallthru
          _
      $region28: #{conv_bn_relu.2} parent=5 // pred_fallthru
        _
      %p1126 = scmp.le.s32.totalorder 2, %s11
      // Predicated region
      $region85: #{conv_bn_relu.2} parent=5 // pred_check
        %p1127 = pneg %p1126
      $region86: #{conv_bn_relu.2} parent=5 // pred_check_branch
        %1129 = sbr.rel (%p1127) target = $region88
      $region87: #{conv_bn_relu.2} parent=5 // pred_region
        %s1130 = ssub.s32 %s11, 2
        // Predicated region
        $region89: #{conv_bn_relu.2} parent=87 // pred_check
          %p1131 = pneg %p87
        $region90: #{conv_bn_relu.2} parent=87 // pred_check_branch
          %1133 = sbr.rel (%p1131) target = $region92
        $region91: #{conv_bn_relu.2} parent=87 // pred_region
          %s1134 = sand.u32 %s72, 1
          %s1135 = sand.u32 %s72, 1
          %s1136 = smul.addr %s1135, 104
          %s1137 = scalar_lea.vmem [#allocation2], %s1136
        $region92: #{conv_bn_relu.2} parent=87 // pred_fallthru
          _
        // Predicated region
        $region93: #{conv_bn_relu.2} parent=87 // pred_check
          %p1138 = pneg %p113
        $region94: #{conv_bn_relu.2} parent=87 // pred_check_branch
          %1140 = sbr.rel (%p1138) target = $region96
        $region95: #{conv_bn_relu.2} parent=87 // pred_region
          %p1141 = scmp.lt.s32.totalorder %s17, 1
          %s1142 = scalar_select %p1141, %s17, 1
          %s1143 = smul.addr %s1142, 8
          %s1144 = scalar_lea.vmem %s3, %s1143
        $region96: #{conv_bn_relu.2} parent=87 // pred_fallthru
          _
        // Predicated region
        $region97: #{conv_bn_relu.2} parent=87 // pred_check
          %p1145 = pneg %p139
        $region98: #{conv_bn_relu.2} parent=87 // pred_check_branch
          %1147 = sbr.rel (%p1145) target = $region100
        $region99: #{conv_bn_relu.2} parent=87 // pred_region
          %p1148 = scmp.lt.s32.totalorder %s17, 1
          %s1149 = scalar_select %p1148, %s17, 1
          %s1150 = smul.addr %s1149, 8
          %s1151 = scalar_lea.vmem %s4, %s1150
        $region100: #{conv_bn_relu.2} parent=87 // pred_fallthru
          _
      $region88: #{conv_bn_relu.2} parent=5 // pred_fallthru
        _
    $region6: #{conv_bn_relu.2} parent=1 // loop_footer
      %s15 = sadd.s32 1, %s11
    $region7: #{conv_bn_relu.2} parent=1 // loop_footer_branch
      %10 = sbr.rel target = $region3
    $region8: #{conv_bn_relu.2} parent=1 // loop_exit
      _

</llo_original>
